<compile_context>
chip_gen: v5e
topology: v5e:2x2
jax: 0.10.0
libtpu: 0.0.40
codegen_flags: <defaults>
</compile_context>

<pallas_src>
import functools

import jax
import jax.numpy as jnp
from jax.experimental import pallas as pl
from jax.experimental.pallas import tpu as pltpu

EPS = 1e-5
_VMEM_LIMIT = 64 * 1024 * 1024   # raise scoped-VMEM cap above v5e's 16 MiB default


def _round_up(a, m):
    return (a + m - 1) // m * m


def _conv_out(h, stride):
    # 3x3 conv, padding=1: floor((h + 2 - 3) / stride) + 1
    return (h - 1) // stride + 1


def _mxu_dot(a, b):
    """MXU matmul, f32 accumulation; full-precision passes for f32 operands."""
    if a.dtype == jnp.float32:
        return jnp.dot(a, b, preferred_element_type=jnp.float32,
                       precision=jax.lax.Precision.HIGHEST)
    return jnp.dot(a, b, preferred_element_type=jnp.float32)


def _zero_halo(pad_ref, h, w, c):
    """Zero only the 1-wide halo border of pad_ref (shape (h+2, w+2, c)).

    The interior is fully overwritten every grid step, so only the border
    needs writing.  Done every step (cheap, O(perimeter)) rather than under
    pl.when(program_id==0) so it stays correct when the batch axis is
    megacore-sharded and each core owns its own scratch buffer.
    """
    zrow = jnp.zeros((1, w + 2, c), pad_ref.dtype)
    zcol = jnp.zeros((h + 2, 1, c), pad_ref.dtype)
    pad_ref[0:1, :, :] = zrow
    pad_ref[h + 1:h + 2, :, :] = zrow
    pad_ref[:, 0:1, :] = zcol
    pad_ref[:, w + 1:w + 2, :] = zcol


# ---------------------------------------------------------------------------
# Kernels
# ---------------------------------------------------------------------------
def conv1_s1_stats_kernel(x_ref, w_ref, y_ref, sum_ref, sq_ref,
                          pad_ref, patch_ref, *, H, W, Cin):
    """stride-1 conv1: zero halo built in VMEM from raw x, im2col matmul,
    per-batch bn1 partial sums."""
    _zero_halo(pad_ref, H, W, Cin)
    pad_ref[1:H + 1, 1:W + 1, :] = x_ref[0].astype(pad_ref.dtype)

    t = 0
    for dy in range(3):
        for dx in range(3):
            patch_ref[:, t * Cin:(t + 1) * Cin] = (
                pad_ref[dy:dy + H, dx:dx + W, :].reshape(H * W, Cin))
            t += 1

    y = _mxu_dot(patch_ref[...], w_ref[...])              # (H*W, Cout) f32
    sum_ref[0] = jnp.sum(y, axis=0, keepdims=True)
    sq_ref[0] = jnp.sum(y * y, axis=0, keepdims=True)
    Cout = y_ref.shape[-1]
    y_ref[0] = y.reshape(H, W, Cout).astype(y_ref.dtype)


def conv1_strided_stats_kernel(xph_ref, w_ref, y_ref, sum_ref, sq_ref,
                               patch_ref, *, stride, Ho, Wo, Cin):
    """stride-s conv1 from the phase-decomposed padded input (unstrided
    static slices), im2col matmul, per-batch bn1 partial sums."""
    s = stride
    t = 0
    for dy in range(3):
        for dx in range(3):
            phase = (dy % s) * s + (dx % s)
            tap = xph_ref[phase,
                          dy // s: dy // s + Ho,
                          dx // s: dx // s + Wo, :]        # (Ho, Wo, Cin)
            patch_ref[:, t * Cin:(t + 1) * Cin] = (
                tap.reshape(Ho * Wo, Cin).astype(patch_ref.dtype))
            t += 1

    y = _mxu_dot(patch_ref[...], w_ref[...])               # (Ho*Wo, Cout) f32
    sum_ref[0] = jnp.sum(y, axis=0, keepdims=True)
    sq_ref[0] = jnp.sum(y * y, axis=0, keepdims=True)
    Cout = y_ref.shape[-1]
    y_ref[0] = y.reshape(Ho, Wo, Cout).astype(y_ref.dtype)


def bn_relu_conv2_stats_kernel(y1_ref, sc_ref, sh_ref, w_ref,
                               y2_ref, sum_ref, sq_ref, pad_ref, patch_ref,
                               *, Ho, Wo, C):
    """bn1-apply + ReLU prologue, conv2 (3x3, pad 1) im2col matmul, per-batch
    bn2 partial sums.  Halo is built in VMEM (BN+ReLU of zero-pad is not 0)."""
    z = y1_ref[0].astype(jnp.float32).reshape(Ho * Wo, C)
    z = jnp.maximum(z * sc_ref[...] + sh_ref[...], 0.0)

    _zero_halo(pad_ref, Ho, Wo, C)
    pad_ref[1:Ho + 1, 1:Wo + 1, :] = z.reshape(Ho, Wo, C).astype(pad_ref.dtype)

    t = 0
    for dy in range(3):
        for dx in range(3):
            patch_ref[:, t * C:(t + 1) * C] = (
                pad_ref[dy:dy + Ho, dx:dx + Wo, :].reshape(Ho * Wo, C))
            t += 1

    y = _mxu_dot(patch_ref[...], w_ref[...])                # (Ho*Wo, C) f32
    sum_ref[0] = jnp.sum(y, axis=0, keepdims=True)
    sq_ref[0] = jnp.sum(y * y, axis=0, keepdims=True)
    y2_ref[0] = y.reshape(Ho, Wo, C).astype(y2_ref.dtype)


def bn2_skip_conv_kernel(y2_ref, sc_ref, sh_ref, xs_ref, w3_ref, b3_ref,
                         o_ref, *, Ho, Wo, Cin):
    """bn2-apply + fused 1x1 skip conv (stride folded into xs layout) +
    add + ReLU."""
    C = o_ref.shape[-1]
    y = y2_ref[0].astype(jnp.float32).reshape(Ho * Wo, C)
    y = y * sc_ref[...] + sh_ref[...]
    xs = xs_ref[0, 0:Ho, 0:Wo, :].reshape(Ho * Wo, Cin)
    skip = _mxu_dot(xs, w3_ref[...]) + b3_ref[...]
    o_ref[0] = jnp.maximum(y + skip, 0.0).reshape(Ho, Wo, C).astype(o_ref.dtype)


def bn2_skip_id_kernel(y2_ref, sc_ref, sh_ref, xs_ref, o_ref, *, Ho, Wo):
    """bn2-apply + identity skip + add + ReLU (stride==1, Cin==Cout)."""
    C = o_ref.shape[-1]
    y = y2_ref[0].astype(jnp.float32).reshape(Ho * Wo, C)
    y = y * sc_ref[...] + sh_ref[...]
    xs = xs_ref[0, 0:Ho, 0:Wo, :].reshape(Ho * Wo, C).astype(jnp.float32)
    o_ref[0] = jnp.maximum(y + xs, 0.0).reshape(Ho, Wo, C).astype(o_ref.dtype)


# ---------------------------------------------------------------------------
# Wrappers
# ---------------------------------------------------------------------------
def _phase_decompose(x, stride):
    """(N,H,W,Cin) -> (N*s*s, Hp/s, Wp/s, Cin), zero pad of 1 folded in.

    Plane (p,q) of batch n holds x_pad[n, s*a+p, s*b+q, :], so a stride-s 3x3
    conv (and the strided 1x1 skip) need only UNSTRIDED static window slices.
    Only used when stride > 1.
    """
    N, H, W, Cin = x.shape
    s = stride
    Hp = _round_up(H + 2, s)
    Wp = _round_up(W + 2, s)
    xp = jnp.pad(x, ((0, 0), (1, Hp - H - 1), (1, Wp - W - 1), (0, 0)))
    xp = xp.reshape(N, Hp // s, s, Wp // s, s, Cin)
    xp = jnp.transpose(xp, (0, 2, 4, 1, 3, 5))
    return xp.reshape(N * s * s, Hp // s, Wp // s, Cin)


def conv1_s1_with_stats(x, w1f):
    N, H, W, Cin = x.shape
    Cout = w1f.shape[-1]
    conv_dtype = w1f.dtype
    return pl.pallas_call(
        functools.partial(conv1_s1_stats_kernel, H=H, W=W, Cin=Cin),
        out_shape=(jax.ShapeDtypeStruct((N, H, W, Cout), conv_dtype),
                   jax.ShapeDtypeStruct((N, 1, Cout), jnp.float32),
                   jax.ShapeDtypeStruct((N, 1, Cout), jnp.float32)),
        grid=(N,),
        in_specs=[
            pl.BlockSpec((1, H, W, Cin), lambda n: (n, 0, 0, 0)),
            pl.BlockSpec((9 * Cin, Cout), lambda n: (0, 0)),
        ],
        out_specs=(
            pl.BlockSpec((1, H, W, Cout), lambda n: (n, 0, 0, 0)),
            pl.BlockSpec((1, 1, Cout), lambda n: (n, 0, 0)),
            pl.BlockSpec((1, 1, Cout), lambda n: (n, 0, 0)),
        ),
        scratch_shapes=[pltpu.VMEM((H + 2, W + 2, Cin), conv_dtype),
                        pltpu.VMEM((H * W, 9 * Cin), conv_dtype)],
        compiler_params=pltpu.CompilerParams(
            dimension_semantics=("parallel",),
            vmem_limit_bytes=_VMEM_LIMIT),
    )(x, w1f)


def conv1_strided_with_stats(xph, w1f, *, Ho, Wo, stride):
    s = stride
    N = xph.shape[0] // (s * s)
    Hps, Wps, Cin = xph.shape[1], xph.shape[2], xph.shape[3]
    Cout = w1f.shape[-1]
    conv_dtype = w1f.dtype
    return pl.pallas_call(
        functools.partial(conv1_strided_stats_kernel, stride=s,
                          Ho=Ho, Wo=Wo, Cin=Cin),
        out_shape=(jax.ShapeDtypeStruct((N, Ho, Wo, Cout), conv_dtype),
                   jax.ShapeDtypeStruct((N, 1, Cout), jnp.float32),
                   jax.ShapeDtypeStruct((N, 1, Cout), jnp.float32)),
        grid=(N,),
        in_specs=[
            pl.BlockSpec((s * s, Hps, Wps, Cin), lambda n: (n, 0, 0, 0)),
            pl.BlockSpec((9 * Cin, Cout), lambda n: (0, 0)),
        ],
        out_specs=(
            pl.BlockSpec((1, Ho, Wo, Cout), lambda n: (n, 0, 0, 0)),
            pl.BlockSpec((1, 1, Cout), lambda n: (n, 0, 0)),
            pl.BlockSpec((1, 1, Cout), lambda n: (n, 0, 0)),
        ),
        scratch_shapes=[pltpu.VMEM((Ho * Wo, 9 * Cin), conv_dtype)],
        compiler_params=pltpu.CompilerParams(
            dimension_semantics=("parallel",),
            vmem_limit_bytes=_VMEM_LIMIT),
    )(xph, w1f)


def bn_relu_conv2_with_stats(y1, scale1, shift1, w2f):
    N, Ho, Wo, C = y1.shape
    conv_dtype = w2f.dtype
    return pl.pallas_call(
        functools.partial(bn_relu_conv2_stats_kernel, Ho=Ho, Wo=Wo, C=C),
        out_shape=(jax.ShapeDtypeStruct((N, Ho, Wo, C), conv_dtype),
                   jax.ShapeDtypeStruct((N, 1, C), jnp.float32),
                   jax.ShapeDtypeStruct((N, 1, C), jnp.float32)),
        grid=(N,),
        in_specs=[
            pl.BlockSpec((1, Ho, Wo, C), lambda n: (n, 0, 0, 0)),
            pl.BlockSpec((1, C), lambda n: (0, 0)),
            pl.BlockSpec((1, C), lambda n: (0, 0)),
            pl.BlockSpec((9 * C, C), lambda n: (0, 0)),
        ],
        out_specs=(
            pl.BlockSpec((1, Ho, Wo, C), lambda n: (n, 0, 0, 0)),
            pl.BlockSpec((1, 1, C), lambda n: (n, 0, 0)),
            pl.BlockSpec((1, 1, C), lambda n: (n, 0, 0)),
        ),
        scratch_shapes=[pltpu.VMEM((Ho + 2, Wo + 2, C), conv_dtype),
                        pltpu.VMEM((Ho * Wo, 9 * C), conv_dtype)],
        compiler_params=pltpu.CompilerParams(
            dimension_semantics=("parallel",),
            vmem_limit_bytes=_VMEM_LIMIT),
    )(y1, scale1, shift1, w2f)


def bn2_skip_add_relu(y2, scale2, shift2, skip_in, w3=None, b3=None, *,
                      stride, Cin):
    N, Ho, Wo, C = y2.shape
    s = stride
    if s == 1:
        # raw x (H == Ho, W == Wo): identity-skip or unstrided 1x1 conv.
        skip_spec = pl.BlockSpec((1, Ho, Wo, Cin), lambda n: (n, 0, 0, 0))
    else:
        # Only DMA the single phase plane the strided skip reads:
        # plane (1%s, 1%s) holds x[s*a, s*b] at offset 0.
        Hps, Wps = skip_in.shape[1], skip_in.shape[2]
        plane = (1 % s) * s + (1 % s)
        skip_spec = pl.BlockSpec(
            (1, Hps, Wps, Cin), lambda n: (n * s * s + plane, 0, 0, 0))

    in_specs = [
        pl.BlockSpec((1, Ho, Wo, C), lambda n: (n, 0, 0, 0)),
        pl.BlockSpec((1, C), lambda n: (0, 0)),
        pl.BlockSpec((1, C), lambda n: (0, 0)),
        skip_spec,
    ]
    if w3 is not None:
        kernel = functools.partial(bn2_skip_conv_kernel, Ho=Ho, Wo=Wo, Cin=Cin)
        in_specs = in_specs + [
            pl.BlockSpec((Cin, C), lambda n: (0, 0)),
            pl.BlockSpec((1, C), lambda n: (0, 0)),
        ]
        args = (y2, scale2, shift2, skip_in, w3, b3.reshape(1, C))
    else:
        kernel = functools.partial(bn2_skip_id_kernel, Ho=Ho, Wo=Wo)
        args = (y2, scale2, shift2, skip_in)
    return pl.pallas_call(
        kernel,
        out_shape=jax.ShapeDtypeStruct((N, Ho, Wo, C), jnp.float32),
        grid=(N,),
        in_specs=in_specs,
        out_specs=pl.BlockSpec((1, Ho, Wo, C), lambda n: (n, 0, 0, 0)),
        compiler_params=pltpu.CompilerParams(
            dimension_semantics=("parallel",),
            vmem_limit_bytes=_VMEM_LIMIT),
    )(*args)


def _bn_scale_shift(gamma, beta, s, sq, count):
    mean = s / count
    var = sq / count - mean * mean          # biased var (BN training mode)
    inv = 1.0 / jnp.sqrt(var + EPS)
    scale = gamma.reshape(1, -1) * inv
    shift = beta.reshape(1, -1) - mean * scale
    return scale, shift


# ---------------------------------------------------------------------------
# Residual forward (matches the PyTorch module)
# ---------------------------------------------------------------------------
def residual_forward(x_nchw, params, *, stride=1, use_1x1conv=False,
                     conv_dtype=jnp.float32):
    x = jnp.transpose(x_nchw, (0, 2, 3, 1)).astype(conv_dtype)  # NCHW -> NHWC
    N, H, W, Cin = x.shape
    Cout = params["w1"].shape[-1]
    Ho, Wo = _conv_out(H, stride), _conv_out(W, stride)

    if not use_1x1conv:
        assert stride == 1 and Cin == Cout, (
            "identity skip needs stride=1 and matching channels "
            "(same constraint as the PyTorch module)")

    # im2col-flattened weights.  conv1/conv2 biases are intentionally dropped:
    # a per-channel constant is exactly cancelled by batch-stat BatchNorm.
    w1f = params["w1"].reshape(9 * Cin, Cout).astype(conv_dtype)
    w2f = params["w2"].reshape(9 * Cout, Cout).astype(conv_dtype)

    if stride == 1:
        # No phase decomposition: conv1 builds its zero halo in VMEM and the
        # skip path reads raw x (saves a padded HBM copy of x).
        y1, s1, sq1 = conv1_s1_with_stats(x, w1f)
        skip_in = x
    else:
        xph = _phase_decompose(x, stride)
        y1, s1, sq1 = conv1_strided_with_stats(xph, w1f, Ho=Ho, Wo=Wo,
                                               stride=stride)
        skip_in = xph   # pass C DMAs only the single phase plane it reads

    cnt = float(N * Ho * Wo)
    scale1, shift1 = _bn_scale_shift(params["g1"], params["be1"],
                                     jnp.sum(s1, axis=0), jnp.sum(sq1, axis=0),
                                     cnt)

    # pass B: bn1-apply + ReLU -> conv2 + per-batch bn2 statistics
    y2, s2, sq2 = bn_relu_conv2_with_stats(y1, scale1, shift1, w2f)
    scale2, shift2 = _bn_scale_shift(params["g2"], params["be2"],
                                     jnp.sum(s2, axis=0), jnp.sum(sq2, axis=0),
                                     cnt)

    # pass C: bn2-apply + skip (fused 1x1 conv or identity) + add + ReLU
    if use_1x1conv:
        out = bn2_skip_add_relu(y2, scale2, shift2, skip_in,
                                params["w3"].astype(conv_dtype),
                                params["b3"].astype(jnp.float32),
                                stride=stride, Cin=Cin)
    else:
        out = bn2_skip_add_relu(y2, scale2, shift2, skip_in,
                                stride=stride, Cin=Cin)
    return jnp.transpose(out, (0, 3, 1, 2))  # NHWC -> NCHW


# Pure-JAX reference (mirrors the PyTorch forward, biases included).
def residual_reference(x_nchw, params, *, stride=1, use_1x1conv=False):
    x = jnp.transpose(x_nchw, (0, 2, 3, 1)).astype(jnp.float32)

    def conv(v, w, b, s, pad):
        y = jax.lax.conv_general_dilated(
            v, w, (s, s), [(pad, pad), (pad, pad)],
            dimension_numbers=("NHWC", "HWIO", "NHWC"),
            precision=jax.lax.Precision.HIGHEST)
        return y + b

    def bn(v, g, be):
        m = jnp.mean(v, axis=(0, 1, 2))
        var = jnp.mean((v - m) ** 2, axis=(0, 1, 2))
        return (v - m) / jnp.sqrt(var + EPS) * g + be

    y = jax.nn.relu(bn(conv(x, params["w1"], params["b1"], stride, 1),
                       params["g1"], params["be1"]))
    y = bn(conv(y, params["w2"], params["b2"], 1, 1),
           params["g2"], params["be2"])
    if use_1x1conv:
        x = conv(x, params["w3"].reshape(1, 1, *params["w3"].shape),
                 params["b3"], stride, 0)
    out = jax.nn.relu(y + x)
    return jnp.transpose(out, (0, 3, 1, 2))


if __name__ == "__main__":
    key = jax.random.PRNGKey(0)
    ks = jax.random.split(key, 8)

    # ---- config 1: Residual(4, 8, use_1x1conv=True, stride=2) -------------
    N, Cin, H, W = 2, 4, 16, 16
    Cout, stride, use_1x1conv = 8, 2, True
    params = {
        # conv weights in (KH, KW, Cin, Cout) (PyTorch (Cout,Cin,KH,KW) transposed)
        "w1": 0.1 * jax.random.normal(ks[0], (3, 3, Cin, Cout), jnp.float32),
        "b1": 0.1 * jax.random.normal(ks[1], (Cout,), jnp.float32),
        "w2": 0.1 * jax.random.normal(ks[2], (3, 3, Cout, Cout), jnp.float32),
        "b2": 0.1 * jax.random.normal(ks[3], (Cout,), jnp.float32),
        "w3": 0.1 * jax.random.normal(ks[4], (Cin, Cout), jnp.float32),
        "b3": 0.1 * jax.random.normal(ks[5], (Cout,), jnp.float32),
        # BatchNorm2d at init: gamma=1, beta=0
        "g1": jnp.ones((Cout,), jnp.float32),
        "be1": jnp.zeros((Cout,), jnp.float32),
        "g2": jnp.ones((Cout,), jnp.float32),
        "be2": jnp.zeros((Cout,), jnp.float32),
    }
    x = jax.random.normal(ks[6], (N, Cin, H, W), jnp.float32)  # NCHW

    out = jax.block_until_ready(
        residual_forward(x, params, stride=stride, use_1x1conv=use_1x1conv))
    ref = jax.block_until_ready(
        residual_reference(x, params, stride=stride, use_1x1conv=use_1x1conv))
    assert out.shape == (N, Cout, H // stride, W // stride), out.shape
    assert jnp.allclose(out, ref, atol=2e-3, rtol=2e-3), \
        float(jnp.max(jnp.abs(out - ref)))

    # bf16 MXU operands + bf16 inter-pass intermediates (v5e/v6e/v7x path),
    # f32 accumulation and f32 BN math.
    out_bf16 = jax.block_until_ready(
        residual_forward(x, params, stride=stride, use_1x1conv=use_1x1conv,
                         conv_dtype=jnp.bfloat16))
    assert jnp.allclose(out_bf16, ref, atol=5e-2, rtol=5e-2), \
        float(jnp.max(jnp.abs(out_bf16 - ref)))

    # ---- config 2: Residual(8, 8) identity skip, stride=1 ------------------
    C2 = 8
    params2 = {
        "w1": 0.1 * jax.random.normal(ks[0], (3, 3, C2, C2), jnp.float32),
        "b1": 0.1 * jax.random.normal(ks[1], (C2,), jnp.float32),
        "w2": 0.1 * jax.random.normal(ks[2], (3, 3, C2, C2), jnp.float32),
        "b2": 0.1 * jax.random.normal(ks[3], (C2,), jnp.float32),
        "g1": jnp.ones((C2,), jnp.float32),
        "be1": jnp.zeros((C2,), jnp.float32),
        "g2": jnp.ones((C2,), jnp.float32),
        "be2": jnp.zeros((C2,), jnp.float32),
    }
    x2 = jax.random.normal(ks[7], (N, C2, H, W), jnp.float32)
    out2 = jax.block_until_ready(
        residual_forward(x2, params2, stride=1, use_1x1conv=False))
    ref2 = jax.block_until_ready(
        residual_reference(x2, params2, stride=1, use_1x1conv=False))
    assert out2.shape == (N, C2, H, W), out2.shape
    assert jnp.allclose(out2, ref2, atol=2e-3, rtol=2e-3), \
        float(jnp.max(jnp.abs(out2 - ref2)))

    print("KERNEL_OK")
</pallas_src>

<mosaic_0001>
module attributes {stable_mosaic.version = 11 : i64} {
  func.func @conv1_strided_stats_kernel(%arg0: i32, %arg1: memref<4x9x9x4xf32, #tpu.memory_space<vmem>>, %arg2: memref<36x8xf32, #tpu.memory_space<vmem>>, %arg3: memref<1x8x8x8xf32, #tpu.memory_space<vmem>>, %arg4: memref<1x1x8xf32, #tpu.memory_space<vmem>>, %arg5: memref<1x1x8xf32, #tpu.memory_space<vmem>>, %arg6: memref<64x36xf32, #tpu.memory_space<vmem>>) attributes {dimension_semantics = [#tpu.dimension_semantics<parallel>], iteration_bounds = array<i64: 2>, scalar_prefetch = 0 : i64, scratch_operands = 1 : i64, tpu.core_type = #tpu.core_type<tc>, window_params = [{transform_indices = @transform_0, window_bounds = array<i64: 4, 9, 9, 4>}, {pipeline_mode = #tpu.pipeline_mode<synchronous>, transform_indices = @transform_1, window_bounds = array<i64: 36, 8>}, {transform_indices = @transform_2, window_bounds = array<i64: 1, 8, 8, 8>}, {transform_indices = @transform_3, window_bounds = array<i64: 1, 1, 8>}, {transform_indices = @transform_4, window_bounds = array<i64: 1, 1, 8>}]} {
    %c0 = arith.constant 0 : index
    %c0_0 = arith.constant 0 : index
    %c0_1 = arith.constant 0 : index
    %c0_2 = arith.constant 0 : index
    %0 = vector.load %arg1[%c0, %c0_0, %c0_1, %c0_2] : memref<4x9x9x4xf32, #tpu.memory_space<vmem>>, vector<1x8x8x4xf32>
    %1 = vector.shape_cast %0 : vector<1x8x8x4xf32> to vector<8x8x4xf32>
    %2 = vector.shape_cast %1 : vector<8x8x4xf32> to vector<64x4xf32>
    %c0_3 = arith.constant 0 : index
    %c0_4 = arith.constant 0 : index
    %3 = vector.load %arg6[%c0_3, %c0_4] : memref<64x36xf32, #tpu.memory_space<vmem>>, vector<64x4xf32>
    tpu.vector_store %arg6[%c0_3, %c0_4], %2 {strides = array<i32>} : memref<64x36xf32, #tpu.memory_space<vmem>>, vector<64x4xf32>,
    %c1 = arith.constant 1 : index
    %c0_5 = arith.constant 0 : index
    %c0_6 = arith.constant 0 : index
    %c0_7 = arith.constant 0 : index
    %4 = vector.load %arg1[%c1, %c0_5, %c0_6, %c0_7] : memref<4x9x9x4xf32, #tpu.memory_space<vmem>>, vector<1x8x8x4xf32>
    %5 = vector.shape_cast %4 : vector<1x8x8x4xf32> to vector<8x8x4xf32>
    %6 = vector.shape_cast %5 : vector<8x8x4xf32> to vector<64x4xf32>
    %c0_8 = arith.constant 0 : index
    %c4 = arith.constant 4 : index
    %7 = vector.load %arg6[%c0_8, %c4] : memref<64x36xf32, #tpu.memory_space<vmem>>, vector<64x4xf32>
    tpu.vector_store %arg6[%c0_8, %c4], %6 {strides = array<i32>} : memref<64x36xf32, #tpu.memory_space<vmem>>, vector<64x4xf32>,
    %c0_9 = arith.constant 0 : index
    %c0_10 = arith.constant 0 : index
    %c1_11 = arith.constant 1 : index
    %c0_12 = arith.constant 0 : index
    %8 = vector.load %arg1[%c0_9, %c0_10, %c1_11, %c0_12] : memref<4x9x9x4xf32, #tpu.memory_space<vmem>>, vector<1x8x8x4xf32>
    %9 = vector.shape_cast %8 : vector<1x8x8x4xf32> to vector<8x8x4xf32>
    %10 = vector.shape_cast %9 : vector<8x8x4xf32> to vector<64x4xf32>
    %c0_13 = arith.constant 0 : index
    %c8 = arith.constant 8 : index
    %11 = vector.load %arg6[%c0_13, %c8] : memref<64x36xf32, #tpu.memory_space<vmem>>, vector<64x4xf32>
    tpu.vector_store %arg6[%c0_13, %c8], %10 {strides = array<i32>} : memref<64x36xf32, #tpu.memory_space<vmem>>, vector<64x4xf32>,
    %c2 = arith.constant 2 : index
    %c0_14 = arith.constant 0 : index
    %c0_15 = arith.constant 0 : index
    %c0_16 = arith.constant 0 : index
    %12 = vector.load %arg1[%c2, %c0_14, %c0_15, %c0_16] : memref<4x9x9x4xf32, #tpu.memory_space<vmem>>, vector<1x8x8x4xf32>
    %13 = vector.shape_cast %12 : vector<1x8x8x4xf32> to vector<8x8x4xf32>
    %14 = vector.shape_cast %13 : vector<8x8x4xf32> to vector<64x4xf32>
    %c0_17 = arith.constant 0 : index
    %c12 = arith.constant 12 : index
    %15 = vector.load %arg6[%c0_17, %c12] : memref<64x36xf32, #tpu.memory_space<vmem>>, vector<64x4xf32>
    tpu.vector_store %arg6[%c0_17, %c12], %14 {strides = array<i32>} : memref<64x36xf32, #tpu.memory_space<vmem>>, vector<64x4xf32>,
    %c3 = arith.constant 3 : index
    %c0_18 = arith.constant 0 : index
    %c0_19 = arith.constant 0 : index
    %c0_20 = arith.constant 0 : index
    %16 = vector.load %arg1[%c3, %c0_18, %c0_19, %c0_20] : memref<4x9x9x4xf32, #tpu.memory_space<vmem>>, vector<1x8x8x4xf32>
    %17 = vector.shape_cast %16 : vector<1x8x8x4xf32> to vector<8x8x4xf32>
    %18 = vector.shape_cast %17 : vector<8x8x4xf32> to vector<64x4xf32>
    %c0_21 = arith.constant 0 : index
    %c16 = arith.constant 16 : index
    %19 = vector.load %arg6[%c0_21, %c16] : memref<64x36xf32, #tpu.memory_space<vmem>>, vector<64x4xf32>
    tpu.vector_store %arg6[%c0_21, %c16], %18 {strides = array<i32>} : memref<64x36xf32, #tpu.memory_space<vmem>>, vector<64x4xf32>,
    %c2_22 = arith.constant 2 : index
    %c0_23 = arith.constant 0 : index
    %c1_24 = arith.constant 1 : index
    %c0_25 = arith.constant 0 : index
    %20 = vector.load %arg1[%c2_22, %c0_23, %c1_24, %c0_25] : memref<4x9x9x4xf32, #tpu.memory_space<vmem>>, vector<1x8x8x4xf32>
    %21 = vector.shape_cast %20 : vector<1x8x8x4xf32> to vector<8x8x4xf32>
    %22 = vector.shape_cast %21 : vector<8x8x4xf32> to vector<64x4xf32>
    %c0_26 = arith.constant 0 : index
    %c20 = arith.constant 20 : index
    %23 = vector.load %arg6[%c0_26, %c20] : memref<64x36xf32, #tpu.memory_space<vmem>>, vector<64x4xf32>
    tpu.vector_store %arg6[%c0_26, %c20], %22 {strides = array<i32>} : memref<64x36xf32, #tpu.memory_space<vmem>>, vector<64x4xf32>,
    %c0_27 = arith.constant 0 : index
    %c1_28 = arith.constant 1 : index
    %c0_29 = arith.constant 0 : index
    %c0_30 = arith.constant 0 : index
    %24 = vector.load %arg1[%c0_27, %c1_28, %c0_29, %c0_30] : memref<4x9x9x4xf32, #tpu.memory_space<vmem>>, vector<1x8x8x4xf32>
    %25 = vector.shape_cast %24 : vector<1x8x8x4xf32> to vector<8x8x4xf32>
    %26 = vector.shape_cast %25 : vector<8x8x4xf32> to vector<64x4xf32>
    %c0_31 = arith.constant 0 : index
    %c24 = arith.constant 24 : index
    %27 = vector.load %arg6[%c0_31, %c24] : memref<64x36xf32, #tpu.memory_space<vmem>>, vector<64x4xf32>
    tpu.vector_store %arg6[%c0_31, %c24], %26 {strides = array<i32>} : memref<64x36xf32, #tpu.memory_space<vmem>>, vector<64x4xf32>,
    %c1_32 = arith.constant 1 : index
    %c1_33 = arith.constant 1 : index
    %c0_34 = arith.constant 0 : index
    %c0_35 = arith.constant 0 : index
    %28 = vector.load %arg1[%c1_32, %c1_33, %c0_34, %c0_35] : memref<4x9x9x4xf32, #tpu.memory_space<vmem>>, vector<1x8x8x4xf32>
    %29 = vector.shape_cast %28 : vector<1x8x8x4xf32> to vector<8x8x4xf32>
    %30 = vector.shape_cast %29 : vector<8x8x4xf32> to vector<64x4xf32>
    %c0_36 = arith.constant 0 : index
    %c28 = arith.constant 28 : index
    %31 = vector.load %arg6[%c0_36, %c28] : memref<64x36xf32, #tpu.memory_space<vmem>>, vector<64x4xf32>
    tpu.vector_store %arg6[%c0_36, %c28], %30 {strides = array<i32>} : memref<64x36xf32, #tpu.memory_space<vmem>>, vector<64x4xf32>,
    %c0_37 = arith.constant 0 : index
    %c1_38 = arith.constant 1 : index
    %c1_39 = arith.constant 1 : index
    %c0_40 = arith.constant 0 : index
    %32 = vector.load %arg1[%c0_37, %c1_38, %c1_39, %c0_40] : memref<4x9x9x4xf32, #tpu.memory_space<vmem>>, vector<1x8x8x4xf32>
    %33 = vector.shape_cast %32 : vector<1x8x8x4xf32> to vector<8x8x4xf32>
    %34 = vector.shape_cast %33 : vector<8x8x4xf32> to vector<64x4xf32>
    %c0_41 = arith.constant 0 : index
    %c32 = arith.constant 32 : index
    %35 = vector.load %arg6[%c0_41, %c32] : memref<64x36xf32, #tpu.memory_space<vmem>>, vector<64x4xf32>
    tpu.vector_store %arg6[%c0_41, %c32], %34 {strides = array<i32>} : memref<64x36xf32, #tpu.memory_space<vmem>>, vector<64x4xf32>,
    %c0_42 = arith.constant 0 : index
    %c0_43 = arith.constant 0 : index
    %36 = vector.load %arg6[%c0_42, %c0_43] : memref<64x36xf32, #tpu.memory_space<vmem>>, vector<64x36xf32>
    %c0_44 = arith.constant 0 : index
    %c0_45 = arith.constant 0 : index
    %37 = vector.load %arg2[%c0_44, %c0_45] : memref<36x8xf32, #tpu.memory_space<vmem>>, vector<36x8xf32>
    %cst = arith.constant dense<0.000000e+00> : vector<64x8xf32>
    %38 = tpu.matmul %36, %37, %cst {dimension_numbers = #tpu.dot_dimension_numbers<[1], [0], [0], [1], [0, 0, 1, 1], [], []>, precision = #tpu.contract_precision<fp32>} : vector<64x36xf32>, vector<36x8xf32>, vector<64x8xf32> -> vector<64x8xf32>
    %cst_46 = arith.constant dense<0.000000e+00> : vector<8xf32>
    %39 = vector.multi_reduction <add>, %38, %cst_46 [0] : vector<64x8xf32> to vector<8xf32>
    %40 = vector.shape_cast %39 : vector<8xf32> to vector<1x8xf32>
    %c0_47 = arith.constant 0 : index
    %c0_48 = arith.constant 0 : index
    %c0_49 = arith.constant 0 : index
    %41 = vector.load %arg4[%c0_47, %c0_48, %c0_49] : memref<1x1x8xf32, #tpu.memory_space<vmem>>, vector<1x1x8xf32>
    %42 = vector.shape_cast %41 : vector<1x1x8xf32> to vector<1x8xf32>
    %43 = vector.shape_cast %40 : vector<1x8xf32> to vector<1x1x8xf32>
    tpu.vector_store %arg4[%c0_47, %c0_48, %c0_49], %43 {strides = array<i32>} : memref<1x1x8xf32, #tpu.memory_space<vmem>>, vector<1x1x8xf32>,
    %44 = arith.mulf %38, %38 : vector<64x8xf32>
    %cst_50 = arith.constant dense<0.000000e+00> : vector<8xf32>
    %45 = vector.multi_reduction <add>, %44, %cst_50 [0] : vector<64x8xf32> to vector<8xf32>
    %46 = vector.shape_cast %45 : vector<8xf32> to vector<1x8xf32>
    %c0_51 = arith.constant 0 : index
    %c0_52 = arith.constant 0 : index
    %c0_53 = arith.constant 0 : index
    %47 = vector.load %arg5[%c0_51, %c0_52, %c0_53] : memref<1x1x8xf32, #tpu.memory_space<vmem>>, vector<1x1x8xf32>
    %48 = vector.shape_cast %47 : vector<1x1x8xf32> to vector<1x8xf32>
    %49 = vector.shape_cast %46 : vector<1x8xf32> to vector<1x1x8xf32>
    tpu.vector_store %arg5[%c0_51, %c0_52, %c0_53], %49 {strides = array<i32>} : memref<1x1x8xf32, #tpu.memory_space<vmem>>, vector<1x1x8xf32>,
    %50 = vector.shape_cast %38 : vector<64x8xf32> to vector<8x8x8xf32>
    %c0_54 = arith.constant 0 : index
    %c0_55 = arith.constant 0 : index
    %c0_56 = arith.constant 0 : index
    %c0_57 = arith.constant 0 : index
    %51 = vector.load %arg3[%c0_54, %c0_55, %c0_56, %c0_57] : memref<1x8x8x8xf32, #tpu.memory_space<vmem>>, vector<1x8x8x8xf32>
    %52 = vector.shape_cast %51 : vector<1x8x8x8xf32> to vector<8x8x8xf32>
    %53 = vector.shape_cast %50 : vector<8x8x8xf32> to vector<1x8x8x8xf32>
    tpu.vector_store %arg3[%c0_54, %c0_55, %c0_56, %c0_57], %53 {strides = array<i32>} : memref<1x8x8x8xf32, #tpu.memory_space<vmem>>, vector<1x8x8x8xf32>,
    return
  }
  func.func @transform_0(%arg0: i32) -> (i32, i32, i32, i32) {
    %c0_i32 = arith.constant 0 : i32
    %c0_i32_0 = arith.constant 0 : i32
    %c0_i32_1 = arith.constant 0 : i32
    %c0_i32_2 = arith.constant 0 : i32
    return %arg0, %c0_i32, %c0_i32_0, %c0_i32_1 : i32, i32, i32, i32
  }
  func.func @transform_1(%arg0: i32) -> (i32, i32) {
    %c0_i32 = arith.constant 0 : i32
    %c0_i32_0 = arith.constant 0 : i32
    %c0_i32_1 = arith.constant 0 : i32
    return %c0_i32, %c0_i32_0 : i32, i32
  }
  func.func @transform_2(%arg0: i32) -> (i32, i32, i32, i32) {
    %c0_i32 = arith.constant 0 : i32
    %c0_i32_0 = arith.constant 0 : i32
    %c0_i32_1 = arith.constant 0 : i32
    %c0_i32_2 = arith.constant 0 : i32
    return %arg0, %c0_i32, %c0_i32_0, %c0_i32_1 : i32, i32, i32, i32
  }
  func.func @transform_3(%arg0: i32) -> (i32, i32, i32) {
    %c0_i32 = arith.constant 0 : i32
    %c0_i32_0 = arith.constant 0 : i32
    %c0_i32_1 = arith.constant 0 : i32
    return %arg0, %c0_i32, %c0_i32_0 : i32, i32, i32
  }
  func.func @transform_4(%arg0: i32) -> (i32, i32, i32) {
    %c0_i32 = arith.constant 0 : i32
    %c0_i32_0 = arith.constant 0 : i32
    %c0_i32_1 = arith.constant 0 : i32
    return %arg0, %c0_i32, %c0_i32_0 : i32, i32, i32
  }
}

</mosaic_0001>

<llo_original>
// kernel: tpu_custom_call.1
$region0: #{tpu_custom_call.1}
  #allocation0 [shape = 'u32[]', space=smem, size = 0x4, offset = 0x4, fixed_abs, tag = 'smem constant byte address 0x4 - core index']
  #allocation1 [shape = 'u32[72,128]{1,0:T(1,128)}', space=vmem, size = 0x9000, scoped, tag = 'internal scratch']
  #allocation2 [shape = 'f32[64,36]{1,0:T(8,128)}', space=vmem, size = 0x8000, scoped, tag = 'scratch operand']
  %s0 = inlined_call_operand.vmem [shape: f32[8,9,9,4], index: 0, kind: input, shape index: {}]
  %s1 = inlined_call_operand.vmem [shape: f32[36,8], index: 1, kind: input, shape index: {}]
  %s2 = inlined_call_operand.hbm [shape: f32[2,8,8,8], index: 2, kind: output, shape index: {0}]
  %s3 = inlined_call_operand.hbm [shape: f32[2,1,8], index: 3, kind: output, shape index: {1}]
  %s4 = inlined_call_operand.hbm [shape: f32[2,1,8], index: 4, kind: output, shape index: {2}]
  %5 = xla_tuple %s2, %s3, %s4
  %s6 = sld [smem:[#allocation0]]
  $region57: #{tpu_custom_call.1} parent=0
    _
  %s8 = ssub.s32 1, %s6
  %s9 = scalar_select 0, %s8, %s6
  $region1: #{tpu_custom_call.1} parent=0
    #allocation3 [shape = 'u8[65536]{0}', space=vmem, size = 0x10000, scoped, tag = 'output window, operand 0']
    #allocation4 [shape = 's32[2]{0}', space=sflag, size = 0x8, scoped, tag = 'scoped memory for tpu_custom_call.1']
    #allocation5 [shape = 'u8[1024]{0}', space=vmem, size = 0x400, scoped, tag = 'output window, operand 1']
    #allocation6 [shape = 's32[2]{0}', space=sflag, size = 0x8, scoped, tag = 'scoped memory for tpu_custom_call.1']
    #allocation7 [shape = 'u8[1024]{0}', space=vmem, size = 0x400, scoped, tag = 'output window, operand 2']
    %10 = vsyncpa [#allocation4], 0
    %s11 = scalar_lea.sflag [#allocation4], 1
    %12 = vsyncpa %s11, 0
    %13 = vsyncpa [#allocation6], 0
    %s14 = scalar_lea.sflag [#allocation6], 1
    %15 = vsyncpa %s14, 0
    loop: start=0, step=1, limit=4
    $region2: #{tpu_custom_call.1} parent=1 // loop_pre_header
      _
    $region3: #{tpu_custom_call.1} parent=1 // loop_header
      %s17 = sphi 0, %s21
      %p18 = scmp.ge.s32.totalorder %s17, 4
      %s27 = sphi 0, %s29
      %s30 = sphi 0, %s27
      %s31 = sphi 0, %s30
      %s47 = sphi 0, %s31
      %s51 = sphi 0, %s51
      %s53 = sphi 0, %s51
      %s54 = sphi 0, %s53
      %s68 = sphi 0, %s54
      %s74 = sphi 0, %s76
      %s77 = sphi 0, %s74
      %s78 = sphi 0, %s77
      %s94 = sphi 0, %s78
      %s100 = sphi 0, %s102
      %s103 = sphi 0, %s100
      %s104 = sphi 0, %s103
      %s120 = sphi 0, %s104
      %s126 = sphi 0, %s128
      %s129 = sphi 0, %s126
      %s130 = sphi 0, %s129
      %s146 = sphi 0, %s130
    $region4: #{tpu_custom_call.1} parent=1 // loop_header_branch
      %20 = sbr.rel (%p18) target = $region8
    $region5: #{tpu_custom_call.1} parent=1 // loop_body
      %s22 = ssub.s32 %s17, 1
      %s23 = ssub.s32 %s17, 2
      %s24 = sadd.s32 %s17, 1
      %s25 = ssub.s32 %s17, %s24
      %p26 = scmp.eq.s32.totalorder %s25, 0
      %s28 = sadd.s32 %s27, 1
      %s29 = scalar_select %p26, %s27, %s28
      %p32 = pneg %p26
      %p33 = scmp.eq.s32.totalorder %s17, 1
      %p34 = por %p32, %p33
      %p35 = scmp.ne.s32.totalorder %s27, %s30
      %p36 = scmp.eq.s32.totalorder %s17, 0
      %p37 = por %p35, %p36
      %p38 = scmp.ne.s32.totalorder %s27, %s30
      %p39 = scmp.eq.s32.totalorder %s22, 1
      %p40 = por %p38, %p39
      %p41 = scmp.ne.s32.totalorder %s30, %s31
      %p42 = scmp.eq.s32.totalorder %s22, 0
      %p43 = por %p41, %p42
      %p44 = scmp.ne.s32.totalorder %s30, %s31
      %p45 = scmp.eq.s32.totalorder %s23, 1
      %p46 = por %p44, %p45
      %p48 = scmp.ne.s32.totalorder %s31, %s47
      %p49 = scmp.eq.s32.totalorder %s23, 0
      %p50 = por %p48, %p49
      %s52 = sadd.s32 %s51, 1
      %p55 = scmp.eq.s32.totalorder %s17, 1
      %p56 = scmp.ne.s32.totalorder %s51, %s53
      %p57 = scmp.eq.s32.totalorder %s17, 0
      %p58 = por %p56, %p57
      %p59 = scmp.ne.s32.totalorder %s51, %s53
      %p60 = scmp.eq.s32.totalorder %s22, 1
      %p61 = por %p59, %p60
      %p62 = scmp.ne.s32.totalorder %s53, %s54
      %p63 = scmp.eq.s32.totalorder %s22, 0
      %p64 = por %p62, %p63
      %p65 = scmp.ne.s32.totalorder %s53, %s54
      %p66 = scmp.eq.s32.totalorder %s23, 1
      %p67 = por %p65, %p66
      %p69 = scmp.ne.s32.totalorder %s54, %s68
      %p70 = scmp.eq.s32.totalorder %s23, 0
      %p71 = por %p69, %p70
      %s72 = ssub.s32 %s17, %s24
      %p73 = scmp.eq.s32.totalorder %s72, 0
      %s75 = sadd.s32 %s74, 1
      %s76 = scalar_select %p73, %s74, %s75
      %p79 = pneg %p73
      %p80 = scmp.eq.s32.totalorder %s17, 1
      %p81 = por %p79, %p80
      %p82 = scmp.ne.s32.totalorder %s74, %s77
      %p83 = scmp.eq.s32.totalorder %s17, 0
      %p84 = por %p82, %p83
      %p85 = scmp.ne.s32.totalorder %s74, %s77
      %p86 = scmp.eq.s32.totalorder %s22, 1
      %p87 = por %p85, %p86
      %p88 = scmp.ne.s32.totalorder %s77, %s78
      %p89 = scmp.eq.s32.totalorder %s22, 0
      %p90 = por %p88, %p89
      %p91 = scmp.ne.s32.totalorder %s77, %s78
      %p92 = scmp.eq.s32.totalorder %s23, 1
      %p93 = por %p91, %p92
      %p95 = scmp.ne.s32.totalorder %s78, %s94
      %p96 = scmp.eq.s32.totalorder %s23, 0
      %p97 = por %p95, %p96
      %s98 = ssub.s32 %s17, %s24
      %p99 = scmp.eq.s32.totalorder %s98, 0
      %s101 = sadd.s32 %s100, 1
      %s102 = scalar_select %p99, %s100, %s101
      %p105 = pneg %p99
      %p106 = scmp.eq.s32.totalorder %s17, 1
      %p107 = por %p105, %p106
      %p108 = scmp.ne.s32.totalorder %s100, %s103
      %p109 = scmp.eq.s32.totalorder %s17, 0
      %p110 = por %p108, %p109
      %p111 = scmp.ne.s32.totalorder %s100, %s103
      %p112 = scmp.eq.s32.totalorder %s22, 1
      %p113 = por %p111, %p112
      %p114 = scmp.ne.s32.totalorder %s103, %s104
      %p115 = scmp.eq.s32.totalorder %s22, 0
      %p116 = por %p114, %p115
      %p117 = scmp.ne.s32.totalorder %s103, %s104
      %p118 = scmp.eq.s32.totalorder %s23, 1
      %p119 = por %p117, %p118
      %p121 = scmp.ne.s32.totalorder %s104, %s120
      %p122 = scmp.eq.s32.totalorder %s23, 0
      %p123 = por %p121, %p122
      %s124 = ssub.s32 %s17, %s24
      %p125 = scmp.eq.s32.totalorder %s124, 0
      %s127 = sadd.s32 %s126, 1
      %s128 = scalar_select %p125, %s126, %s127
      %p131 = pneg %p125
      %p132 = scmp.eq.s32.totalorder %s17, 1
      %p133 = por %p131, %p132
      %p134 = scmp.ne.s32.totalorder %s126, %s129
      %p135 = scmp.eq.s32.totalorder %s17, 0
      %p136 = por %p134, %p135
      %p137 = scmp.ne.s32.totalorder %s126, %s129
      %p138 = scmp.eq.s32.totalorder %s22, 1
      %p139 = por %p137, %p138
      %p140 = scmp.ne.s32.totalorder %s129, %s130
      %p141 = scmp.eq.s32.totalorder %s22, 0
      %p142 = por %p140, %p141
      %p143 = scmp.ne.s32.totalorder %s129, %s130
      %p144 = scmp.eq.s32.totalorder %s23, 1
      %p145 = por %p143, %p144
      %p147 = scmp.ne.s32.totalorder %s130, %s146
      %p148 = scmp.eq.s32.totalorder %s23, 0
      %p149 = por %p147, %p148
      %p150 = scmp.le.s32.totalorder 1, %s17
      %p151 = scmp.lt.s32.totalorder %s17, 3
      %p152 = pnand %p150, %p151
      %p153 = pneg %p152
      // Predicated region
      $region9: #{tpu_custom_call.1} parent=5 // pred_check
        _
      $region10: #{tpu_custom_call.1} parent=5 // pred_check_branch
        %155 = sbr.rel (%p152) target = $region12
      $region11: #{tpu_custom_call.1} parent=5 // pred_region
        %s156 = ssub.s32 %s17, 1
        // Predicated region
        $region13: #{tpu_custom_call.1} parent=11 // pred_check
          %p157 = pneg %p64
        $region14: #{tpu_custom_call.1} parent=11 // pred_check_branch
          %159 = sbr.rel (%p157) target = $region16
        $region15: #{tpu_custom_call.1} parent=11 // pred_region
          _
        $region16: #{tpu_custom_call.1} parent=11 // pred_fallthru
          _
      $region12: #{tpu_custom_call.1} parent=5 // pred_fallthru
        _
      %p160 = scmp.lt.s32.totalorder %s17, 2
      // Predicated region
      $region17: #{tpu_custom_call.1} parent=5 // pred_check
        %p161 = pneg %p160
      $region18: #{tpu_custom_call.1} parent=5 // pred_check_branch
        %163 = sbr.rel (%p161) target = $region20
      $region19: #{tpu_custom_call.1} parent=5 // pred_region
        // Predicated region
        $region21: #{tpu_custom_call.1} parent=19 // pred_check
          %p164 = pneg %p37
        $region22: #{tpu_custom_call.1} parent=19 // pred_check_branch
          %166 = sbr.rel (%p164) target = $region24
        $region23: #{tpu_custom_call.1} parent=19 // pred_region
          %s167 = smul.u32 4, %s17
          %p168 = scmp.lt.s32.totalorder %s167, 7
          %s169 = scalar_select %p168, %s167, 7
          %s170 = smul.addr %s169, 18
          %s171 = smul.addr %s170, 8
          %s172 = scalar_lea.vmem %s0, %s171
          %s173 = smul.u32 4, %s17
        $region24: #{tpu_custom_call.1} parent=19 // pred_fallthru
          _
      $region20: #{tpu_custom_call.1} parent=5 // pred_fallthru
        _
      %p174 = scmp.le.s32.totalorder 1, %s17
      %p175 = scmp.lt.s32.totalorder %s17, 3
      %p176 = pnand %p174, %p175
      %p177 = pneg %p176
      // Predicated region
      $region25: #{tpu_custom_call.1} parent=5 // pred_check
        _
      $region26: #{tpu_custom_call.1} parent=5 // pred_check_branch
        %179 = sbr.rel (%p176) target = $region28
      $region27: #{tpu_custom_call.1} parent=5 // pred_region
        %s180 = ssub.s32 %s17, 1
        %s181 = smul.u32 4, %s22
        %p182 = scmp.lt.s32.totalorder %s181, 7
        %s183 = scalar_select %p182, %s181, 7
        %s184 = smul.addr %s183, 18
        %s185 = smul.addr %s184, 8
        %s186 = scalar_lea.vmem %s0, %s185
        %p187 = pneg %p43
        %p188 = pneg %p40
        %p189 = pneg %p64
        %p190 = pneg %p61
        %p191 = pneg %p90
        %p192 = pneg %p87
        %s193 = sand.u32 %s77, 1
        %s194 = scalar_lea.sflag [#allocation4], %s193
        %s195 = sand.u32 %s77, 1
        %s196 = smul.addr %s195, 64
        %s197 = scalar_lea.vmem [#allocation3], %s196
        %p198 = pneg %p116
        %p199 = pneg %p113
        %s200 = sand.u32 %s22, 1
        %s201 = scalar_lea.sflag [#allocation6], %s200
        %s202 = sand.u32 %s103, 1
        %s203 = scalar_lea.vmem [#allocation5], %s202
        %p204 = pneg %p142
        %p205 = pneg %p139
        %s206 = sand.u32 %s22, 1
        %s207 = scalar_lea.sflag [#allocation6], %s206
        %s208 = sand.u32 %s129, 1
        %s209 = scalar_lea.vmem [#allocation7], %s208
        %s210 = smul.u32 4, %s22
        %p211 = scmp.lt.s32.totalorder %s210, 7
        %s212 = scalar_select %p211, %s210, 7
        %s213 = smul.addr %s212, 18
        %s214 = smul.addr %s213, 8
        %s215 = scalar_lea.vmem %s0, %s214
        %s216 = smul.u32 4, %s22
        %v217 = vld [vmem:[%s215] sm:$0xff]
        %v218 = vld [vmem:[%s215 + $0x10] sm:$0xff]
        %v219 = vld [vmem:[%s215 + $0x20] sm:$0xff]
        %v220 = vld [vmem:[%s215 + $0x30] sm:$0xff]
        %v221 = vld [vmem:[%s215 + $0x40] sm:$0xff]
        %v222 = vld [vmem:[%s215 + $0x50] sm:$0xff]
        %v223 = vld [vmem:[%s215 + $0x60] sm:$0xff]
        %v224 = vld [vmem:[%s215 + $0x70] sm:$0xff]
        %vm225 = vcmask 31744
        %226 = vst.msk [vmem:[#allocation2] sm:$0xff] %vm225, %v217
        %227 = vst.msk [vmem:[#allocation2 + $0x8] sm:$0xff] %vm225, %v218
        %228 = vst.msk [vmem:[#allocation2 + $0x10] sm:$0xff] %vm225, %v219
        %229 = vst.msk [vmem:[#allocation2 + $0x18] sm:$0xff] %vm225, %v220
        %230 = vst.msk [vmem:[#allocation2 + $0x20] sm:$0xff] %vm225, %v221
        %231 = vst.msk [vmem:[#allocation2 + $0x28] sm:$0xff] %vm225, %v222
        %232 = vst.msk [vmem:[#allocation2 + $0x30] sm:$0xff] %vm225, %v223
        %233 = vst.msk [vmem:[#allocation2 + $0x38] sm:$0xff] %vm225, %v224
        %s234 = scalar_lea.vmem %s215, 144
        %v235 = vld [vmem:[%s234] sm:$0xff]
        %v236 = vld [vmem:[%s234 + $0x10] sm:$0xff]
        %v237 = vld [vmem:[%s234 + $0x20] sm:$0xff]
        %v238 = vld [vmem:[%s234 + $0x30] sm:$0xff]
        %v239 = vld [vmem:[%s234 + $0x40] sm:$0xff]
        %v240 = vld [vmem:[%s234 + $0x50] sm:$0xff]
        %v241 = vld [vmem:[%s234 + $0x60] sm:$0xff]
        %v242 = vld [vmem:[%s234 + $0x70] sm:$0xff]
        %251 = vrot.lane.b32.xlu0 %v235, 4
        %v252 = vpop.permute.xlu0 %251
        %253 = vrot.lane.b32.xlu0 %v236, 4
        %v254 = vpop.permute.xlu0 %253
        %255 = vrot.lane.b32.xlu0 %v237, 4
        %v256 = vpop.permute.xlu0 %255
        %257 = vrot.lane.b32.xlu0 %v238, 4
        %v258 = vpop.permute.xlu0 %257
        %259 = vrot.lane.b32.xlu0 %v239, 4
        %v260 = vpop.permute.xlu0 %259
        %261 = vrot.lane.b32.xlu0 %v240, 4
        %v262 = vpop.permute.xlu0 %261
        %263 = vrot.lane.b32.xlu0 %v241, 4
        %v264 = vpop.permute.xlu0 %263
        %265 = vrot.lane.b32.xlu0 %v242, 4
        %v266 = vpop.permute.xlu0 %265
        %vm275 = vcmask 64544
        %276 = vst.msk [vmem:[#allocation2] sm:$0xff] %vm275, %v252
        %277 = vst.msk [vmem:[#allocation2 + $0x8] sm:$0xff] %vm275, %v254
        %278 = vst.msk [vmem:[#allocation2 + $0x10] sm:$0xff] %vm275, %v256
        %279 = vst.msk [vmem:[#allocation2 + $0x18] sm:$0xff] %vm275, %v258
        %280 = vst.msk [vmem:[#allocation2 + $0x20] sm:$0xff] %vm275, %v260
        %281 = vst.msk [vmem:[#allocation2 + $0x28] sm:$0xff] %vm275, %v262
        %282 = vst.msk [vmem:[#allocation2 + $0x30] sm:$0xff] %vm275, %v264
        %283 = vst.msk [vmem:[#allocation2 + $0x38] sm:$0xff] %vm275, %v266
        %v284 = vld [vmem:[%s215 + $0x1] sm:$0xff]
        %v285 = vld [vmem:[%s215 + $0x11] sm:$0xff]
        %v286 = vld [vmem:[%s215 + $0x21] sm:$0xff]
        %v287 = vld [vmem:[%s215 + $0x31] sm:$0xff]
        %v288 = vld [vmem:[%s215 + $0x41] sm:$0xff]
        %v289 = vld [vmem:[%s215 + $0x51] sm:$0xff]
        %v290 = vld [vmem:[%s215 + $0x61] sm:$0xff]
        %v291 = vld [vmem:[%s215 + $0x71] sm:$0xff]
        %300 = vrot.lane.b32.xlu0 %v284, 8
        %v301 = vpop.permute.xlu0 %300
        %302 = vrot.lane.b32.xlu0 %v285, 8
        %v303 = vpop.permute.xlu0 %302
        %304 = vrot.lane.b32.xlu0 %v286, 8
        %v305 = vpop.permute.xlu0 %304
        %306 = vrot.lane.b32.xlu0 %v287, 8
        %v307 = vpop.permute.xlu0 %306
        %308 = vrot.lane.b32.xlu0 %v288, 8
        %v309 = vpop.permute.xlu0 %308
        %310 = vrot.lane.b32.xlu0 %v289, 8
        %v311 = vpop.permute.xlu0 %310
        %312 = vrot.lane.b32.xlu0 %v290, 8
        %v313 = vpop.permute.xlu0 %312
        %314 = vrot.lane.b32.xlu0 %v291, 8
        %v315 = vpop.permute.xlu0 %314
        %vm324 = vcmask 97344
        %325 = vst.msk [vmem:[#allocation2] sm:$0xff] %vm324, %v301
        %326 = vst.msk [vmem:[#allocation2 + $0x8] sm:$0xff] %vm324, %v303
        %327 = vst.msk [vmem:[#allocation2 + $0x10] sm:$0xff] %vm324, %v305
        %328 = vst.msk [vmem:[#allocation2 + $0x18] sm:$0xff] %vm324, %v307
        %329 = vst.msk [vmem:[#allocation2 + $0x20] sm:$0xff] %vm324, %v309
        %330 = vst.msk [vmem:[#allocation2 + $0x28] sm:$0xff] %vm324, %v311
        %331 = vst.msk [vmem:[#allocation2 + $0x30] sm:$0xff] %vm324, %v313
        %332 = vst.msk [vmem:[#allocation2 + $0x38] sm:$0xff] %vm324, %v315
        %s333 = scalar_lea.vmem %s215, 288
        %v334 = vld [vmem:[%s333] sm:$0xff]
        %v335 = vld [vmem:[%s333 + $0x10] sm:$0xff]
        %v336 = vld [vmem:[%s333 + $0x20] sm:$0xff]
        %v337 = vld [vmem:[%s333 + $0x30] sm:$0xff]
        %v338 = vld [vmem:[%s333 + $0x40] sm:$0xff]
        %v339 = vld [vmem:[%s333 + $0x50] sm:$0xff]
        %v340 = vld [vmem:[%s333 + $0x60] sm:$0xff]
        %v341 = vld [vmem:[%s333 + $0x70] sm:$0xff]
        %350 = vrot.lane.b32.xlu0 %v334, 12
        %v351 = vpop.permute.xlu0 %350
        %352 = vrot.lane.b32.xlu0 %v335, 12
        %v353 = vpop.permute.xlu0 %352
        %354 = vrot.lane.b32.xlu0 %v336, 12
        %v355 = vpop.permute.xlu0 %354
        %356 = vrot.lane.b32.xlu0 %v337, 12
        %v357 = vpop.permute.xlu0 %356
        %358 = vrot.lane.b32.xlu0 %v338, 12
        %v359 = vpop.permute.xlu0 %358
        %360 = vrot.lane.b32.xlu0 %v339, 12
        %v361 = vpop.permute.xlu0 %360
        %362 = vrot.lane.b32.xlu0 %v340, 12
        %v363 = vpop.permute.xlu0 %362
        %364 = vrot.lane.b32.xlu0 %v341, 12
        %v365 = vpop.permute.xlu0 %364
        %vm374 = vcmask 130144
        %375 = vst.msk [vmem:[#allocation2] sm:$0xff] %vm374, %v351
        %376 = vst.msk [vmem:[#allocation2 + $0x8] sm:$0xff] %vm374, %v353
        %377 = vst.msk [vmem:[#allocation2 + $0x10] sm:$0xff] %vm374, %v355
        %378 = vst.msk [vmem:[#allocation2 + $0x18] sm:$0xff] %vm374, %v357
        %379 = vst.msk [vmem:[#allocation2 + $0x20] sm:$0xff] %vm374, %v359
        %380 = vst.msk [vmem:[#allocation2 + $0x28] sm:$0xff] %vm374, %v361
        %381 = vst.msk [vmem:[#allocation2 + $0x30] sm:$0xff] %vm374, %v363
        %382 = vst.msk [vmem:[#allocation2 + $0x38] sm:$0xff] %vm374, %v365
        %s383 = scalar_lea.vmem %s215, 432
        %v384 = vld [vmem:[%s383] sm:$0xff]
        %v385 = vld [vmem:[%s383 + $0x10] sm:$0xff]
        %v386 = vld [vmem:[%s383 + $0x20] sm:$0xff]
        %v387 = vld [vmem:[%s383 + $0x30] sm:$0xff]
        %v388 = vld [vmem:[%s383 + $0x40] sm:$0xff]
        %v389 = vld [vmem:[%s383 + $0x50] sm:$0xff]
        %v390 = vld [vmem:[%s383 + $0x60] sm:$0xff]
        %v391 = vld [vmem:[%s383 + $0x70] sm:$0xff]
        %400 = vrot.lane.b32.xlu0 %v384, 16
        %v401 = vpop.permute.xlu0 %400
        %402 = vrot.lane.b32.xlu0 %v385, 16
        %v403 = vpop.permute.xlu0 %402
        %404 = vrot.lane.b32.xlu0 %v386, 16
        %v405 = vpop.permute.xlu0 %404
        %406 = vrot.lane.b32.xlu0 %v387, 16
        %v407 = vpop.permute.xlu0 %406
        %408 = vrot.lane.b32.xlu0 %v388, 16
        %v409 = vpop.permute.xlu0 %408
        %410 = vrot.lane.b32.xlu0 %v389, 16
        %v411 = vpop.permute.xlu0 %410
        %412 = vrot.lane.b32.xlu0 %v390, 16
        %v413 = vpop.permute.xlu0 %412
        %414 = vrot.lane.b32.xlu0 %v391, 16
        %v415 = vpop.permute.xlu0 %414
        %vm424 = vcmask 162944
        %425 = vst.msk [vmem:[#allocation2] sm:$0xff] %vm424, %v401
        %426 = vst.msk [vmem:[#allocation2 + $0x8] sm:$0xff] %vm424, %v403
        %427 = vst.msk [vmem:[#allocation2 + $0x10] sm:$0xff] %vm424, %v405
        %428 = vst.msk [vmem:[#allocation2 + $0x18] sm:$0xff] %vm424, %v407
        %429 = vst.msk [vmem:[#allocation2 + $0x20] sm:$0xff] %vm424, %v409
        %430 = vst.msk [vmem:[#allocation2 + $0x28] sm:$0xff] %vm424, %v411
        %431 = vst.msk [vmem:[#allocation2 + $0x30] sm:$0xff] %vm424, %v413
        %432 = vst.msk [vmem:[#allocation2 + $0x38] sm:$0xff] %vm424, %v415
        %v433 = vld [vmem:[%s333 + $0x1] sm:$0xff]
        %v434 = vld [vmem:[%s333 + $0x11] sm:$0xff]
        %v435 = vld [vmem:[%s333 + $0x21] sm:$0xff]
        %v436 = vld [vmem:[%s333 + $0x31] sm:$0xff]
        %v437 = vld [vmem:[%s333 + $0x41] sm:$0xff]
        %v438 = vld [vmem:[%s333 + $0x51] sm:$0xff]
        %v439 = vld [vmem:[%s333 + $0x61] sm:$0xff]
        %v440 = vld [vmem:[%s333 + $0x71] sm:$0xff]
        %449 = vrot.lane.b32.xlu0 %v433, 20
        %v450 = vpop.permute.xlu0 %449
        %451 = vrot.lane.b32.xlu0 %v434, 20
        %v452 = vpop.permute.xlu0 %451
        %453 = vrot.lane.b32.xlu0 %v435, 20
        %v454 = vpop.permute.xlu0 %453
        %455 = vrot.lane.b32.xlu0 %v436, 20
        %v456 = vpop.permute.xlu0 %455
        %457 = vrot.lane.b32.xlu0 %v437, 20
        %v458 = vpop.permute.xlu0 %457
        %459 = vrot.lane.b32.xlu0 %v438, 20
        %v460 = vpop.permute.xlu0 %459
        %461 = vrot.lane.b32.xlu0 %v439, 20
        %v462 = vpop.permute.xlu0 %461
        %463 = vrot.lane.b32.xlu0 %v440, 20
        %v464 = vpop.permute.xlu0 %463
        %vm473 = vcmask 195744
        %474 = vst.msk [vmem:[#allocation2] sm:$0xff] %vm473, %v450
        %475 = vst.msk [vmem:[#allocation2 + $0x8] sm:$0xff] %vm473, %v452
        %476 = vst.msk [vmem:[#allocation2 + $0x10] sm:$0xff] %vm473, %v454
        %477 = vst.msk [vmem:[#allocation2 + $0x18] sm:$0xff] %vm473, %v456
        %478 = vst.msk [vmem:[#allocation2 + $0x20] sm:$0xff] %vm473, %v458
        %479 = vst.msk [vmem:[#allocation2 + $0x28] sm:$0xff] %vm473, %v460
        %480 = vst.msk [vmem:[#allocation2 + $0x30] sm:$0xff] %vm473, %v462
        %481 = vst.msk [vmem:[#allocation2 + $0x38] sm:$0xff] %vm473, %v464
        %s482 = scalar_lea.vmem %s215, 16
        %v483 = vld [vmem:[%s482] sm:$0xff]
        %v484 = vld [vmem:[%s482 + $0x10] sm:$0xff]
        %v485 = vld [vmem:[%s482 + $0x20] sm:$0xff]
        %v486 = vld [vmem:[%s482 + $0x30] sm:$0xff]
        %v487 = vld [vmem:[%s482 + $0x40] sm:$0xff]
        %v488 = vld [vmem:[%s482 + $0x50] sm:$0xff]
        %v489 = vld [vmem:[%s482 + $0x60] sm:$0xff]
        %v490 = vld [vmem:[%s482 + $0x70] sm:$0xff]
        %499 = vrot.lane.b32.xlu0 %v483, 24
        %v500 = vpop.permute.xlu0 %499
        %501 = vrot.lane.b32.xlu0 %v484, 24
        %v502 = vpop.permute.xlu0 %501
        %503 = vrot.lane.b32.xlu0 %v485, 24
        %v504 = vpop.permute.xlu0 %503
        %505 = vrot.lane.b32.xlu0 %v486, 24
        %v506 = vpop.permute.xlu0 %505
        %507 = vrot.lane.b32.xlu0 %v487, 24
        %v508 = vpop.permute.xlu0 %507
        %509 = vrot.lane.b32.xlu0 %v488, 24
        %v510 = vpop.permute.xlu0 %509
        %511 = vrot.lane.b32.xlu0 %v489, 24
        %v512 = vpop.permute.xlu0 %511
        %513 = vrot.lane.b32.xlu0 %v490, 24
        %v514 = vpop.permute.xlu0 %513
        %vm523 = vcmask 228544
        %524 = vst.msk [vmem:[#allocation2] sm:$0xff] %vm523, %v500
        %525 = vst.msk [vmem:[#allocation2 + $0x8] sm:$0xff] %vm523, %v502
        %526 = vst.msk [vmem:[#allocation2 + $0x10] sm:$0xff] %vm523, %v504
        %527 = vst.msk [vmem:[#allocation2 + $0x18] sm:$0xff] %vm523, %v506
        %528 = vst.msk [vmem:[#allocation2 + $0x20] sm:$0xff] %vm523, %v508
        %529 = vst.msk [vmem:[#allocation2 + $0x28] sm:$0xff] %vm523, %v510
        %530 = vst.msk [vmem:[#allocation2 + $0x30] sm:$0xff] %vm523, %v512
        %531 = vst.msk [vmem:[#allocation2 + $0x38] sm:$0xff] %vm523, %v514
        %s532 = scalar_lea.vmem %s215, 160
        %v533 = vld [vmem:[%s532] sm:$0xff]
        %v534 = vld [vmem:[%s532 + $0x10] sm:$0xff]
        %v535 = vld [vmem:[%s532 + $0x20] sm:$0xff]
        %v536 = vld [vmem:[%s532 + $0x30] sm:$0xff]
        %v537 = vld [vmem:[%s532 + $0x40] sm:$0xff]
        %v538 = vld [vmem:[%s532 + $0x50] sm:$0xff]
        %v539 = vld [vmem:[%s532 + $0x60] sm:$0xff]
        %v540 = vld [vmem:[%s532 + $0x70] sm:$0xff]
        %549 = vrot.lane.b32.xlu0 %v533, 28
        %v550 = vpop.permute.xlu0 %549
        %551 = vrot.lane.b32.xlu0 %v534, 28
        %v552 = vpop.permute.xlu0 %551
        %553 = vrot.lane.b32.xlu0 %v535, 28
        %v554 = vpop.permute.xlu0 %553
        %555 = vrot.lane.b32.xlu0 %v536, 28
        %v556 = vpop.permute.xlu0 %555
        %557 = vrot.lane.b32.xlu0 %v537, 28
        %v558 = vpop.permute.xlu0 %557
        %559 = vrot.lane.b32.xlu0 %v538, 28
        %v560 = vpop.permute.xlu0 %559
        %561 = vrot.lane.b32.xlu0 %v539, 28
        %v562 = vpop.permute.xlu0 %561
        %563 = vrot.lane.b32.xlu0 %v540, 28
        %v564 = vpop.permute.xlu0 %563
        %vm573 = vcmask 261344
        %574 = vst.msk [vmem:[#allocation2] sm:$0xff] %vm573, %v550
        %575 = vst.msk [vmem:[#allocation2 + $0x8] sm:$0xff] %vm573, %v552
        %576 = vst.msk [vmem:[#allocation2 + $0x10] sm:$0xff] %vm573, %v554
        %577 = vst.msk [vmem:[#allocation2 + $0x18] sm:$0xff] %vm573, %v556
        %578 = vst.msk [vmem:[#allocation2 + $0x20] sm:$0xff] %vm573, %v558
        %579 = vst.msk [vmem:[#allocation2 + $0x28] sm:$0xff] %vm573, %v560
        %580 = vst.msk [vmem:[#allocation2 + $0x30] sm:$0xff] %vm573, %v562
        %581 = vst.msk [vmem:[#allocation2 + $0x38] sm:$0xff] %vm573, %v564
        %v582 = vld [vmem:[%s482 + $0x1] sm:$0xff]
        %v583 = vld [vmem:[%s482 + $0x11] sm:$0xff]
        %v584 = vld [vmem:[%s482 + $0x21] sm:$0xff]
        %v585 = vld [vmem:[%s482 + $0x31] sm:$0xff]
        %v586 = vld [vmem:[%s482 + $0x41] sm:$0xff]
        %v587 = vld [vmem:[%s482 + $0x51] sm:$0xff]
        %v588 = vld [vmem:[%s482 + $0x61] sm:$0xff]
        %v589 = vld [vmem:[%s482 + $0x71] sm:$0xff]
        %598 = vrot.lane.b32.xlu0 %v582, 32
        %v599 = vpop.permute.xlu0 %598
        %600 = vrot.lane.b32.xlu0 %v583, 32
        %v601 = vpop.permute.xlu0 %600
        %602 = vrot.lane.b32.xlu0 %v584, 32
        %v603 = vpop.permute.xlu0 %602
        %604 = vrot.lane.b32.xlu0 %v585, 32
        %v605 = vpop.permute.xlu0 %604
        %606 = vrot.lane.b32.xlu0 %v586, 32
        %v607 = vpop.permute.xlu0 %606
        %608 = vrot.lane.b32.xlu0 %v587, 32
        %v609 = vpop.permute.xlu0 %608
        %610 = vrot.lane.b32.xlu0 %v588, 32
        %v611 = vpop.permute.xlu0 %610
        %612 = vrot.lane.b32.xlu0 %v589, 32
        %v613 = vpop.permute.xlu0 %612
        %vm622 = vcmask 294144
        %623 = vst.msk [vmem:[#allocation2] sm:$0xff] %vm622, %v599
        %624 = vst.msk [vmem:[#allocation2 + $0x8] sm:$0xff] %vm622, %v601
        %625 = vst.msk [vmem:[#allocation2 + $0x10] sm:$0xff] %vm622, %v603
        %626 = vst.msk [vmem:[#allocation2 + $0x18] sm:$0xff] %vm622, %v605
        %627 = vst.msk [vmem:[#allocation2 + $0x20] sm:$0xff] %vm622, %v607
        %628 = vst.msk [vmem:[#allocation2 + $0x28] sm:$0xff] %vm622, %v609
        %629 = vst.msk [vmem:[#allocation2 + $0x30] sm:$0xff] %vm622, %v611
        %630 = vst.msk [vmem:[#allocation2 + $0x38] sm:$0xff] %vm622, %v613
        %v631 = vld [vmem:[#allocation2] sm:$0xff]
        %v632 = vld [vmem:[#allocation2 + $0x8] sm:$0xff]
        %v633 = vld [vmem:[#allocation2 + $0x10] sm:$0xff]
        %v634 = vld [vmem:[#allocation2 + $0x18] sm:$0xff]
        %v635 = vld [vmem:[#allocation2 + $0x20] sm:$0xff]
        %v636 = vld [vmem:[#allocation2 + $0x28] sm:$0xff]
        %v637 = vld [vmem:[#allocation2 + $0x30] sm:$0xff]
        %v638 = vld [vmem:[#allocation2 + $0x38] sm:$0xff]
        %v639 = vld [vmem:[%s1] sm:$0xff]
        %v640 = vld [vmem:[%s1 + $0x8] sm:$0xff]
        %v641 = vld [vmem:[%s1 + $0x10] sm:$0xff]
        %v642 = vld [vmem:[%s1 + $0x18] sm:$0xff]
        %v643 = vld [vmem:[%s1 + $0x20] sm:$0xf]
        %vm644 = vcmask 293888
        %v646 = vsel %vm644, %v631, 0
        %v649 = vsel %vm644, %v632, 0
        %v652 = vsel %vm644, %v633, 0
        %v655 = vsel %vm644, %v634, 0
        %v658 = vsel %vm644, %v635, 0
        %v661 = vsel %vm644, %v636, 0
        %v664 = vsel %vm644, %v637, 0
        %v667 = vsel %vm644, %v638, 0
        %vm669 = vcmask 1043456
        %v671 = vsel %vm669, %v643, 0
        %673 = vmatpush.msra.mxu0 0.0
        %674 = vmatpush.msra.mxu0 0.0
        %675 = vmatpush.msra.mxu0 0.0
        %676 = vmatpush.msra.mxu0 0.0
        %677 = vmatpush.msra.mxu0 0.0
        %678 = vmatpush.msra.mxu0 0.0
        %679 = vmatpush.msra.mxu0 0.0
        %680 = vmatpush.msra.mxu0 0.0
        %681 = vmatpush.msra.mxu0 0.0
        %682 = vmatpush.msra.mxu0 0.0
        %683 = vmatpush.msra.mxu0 0.0
        %v684 = vand.u32 %v671, 4294901760
        %685 = vmatpush.msra.mxu0 %v684
        %v686 = vand.u32 %v642, 4294901760
        %687 = vmatpush.msra.mxu0 %v686
        %v688 = vand.u32 %v641, 4294901760
        %689 = vmatpush.msra.mxu0 %v688
        %v690 = vand.u32 %v640, 4294901760
        %691 = vmatpush.msra.mxu0 %v690
        %v692 = vand.u32 %v639, 4294901760
        %693 = vmatpush.msra.mxu0 %v692
        %v694 = vand.u32 %v646, 4294901760
        %v695 = vsub.f32 %v646, %v694
        %v696 = vand.u32 %v695, 4294901760
        %v697 = vsub.f32 %v695, %v696
        %v698 = vand.u32 %v697, 4294901760
        %699 = vmatmul.f32.gmra.mxu0 %v698
        %v700 = vpop.f32.mrf.mxu0
        %v701 = vadd.f32 0.0, %v700
        %v702 = vand.u32 %v649, 4294901760
        %v703 = vsub.f32 %v649, %v702
        %v704 = vand.u32 %v703, 4294901760
        %v705 = vsub.f32 %v703, %v704
        %v706 = vand.u32 %v705, 4294901760
        %707 = vmatmul.f32.gmra.mxu0 %v706
        %v708 = vpop.f32.mrf.mxu0
        %v709 = vadd.f32 0.0, %v708
        %v710 = vand.u32 %v652, 4294901760
        %v711 = vsub.f32 %v652, %v710
        %v712 = vand.u32 %v711, 4294901760
        %v713 = vsub.f32 %v711, %v712
        %v714 = vand.u32 %v713, 4294901760
        %715 = vmatmul.f32.gmra.mxu0 %v714
        %v716 = vpop.f32.mrf.mxu0
        %v717 = vadd.f32 0.0, %v716
        %v718 = vand.u32 %v655, 4294901760
        %v719 = vsub.f32 %v655, %v718
        %v720 = vand.u32 %v719, 4294901760
        %v721 = vsub.f32 %v719, %v720
        %v722 = vand.u32 %v721, 4294901760
        %723 = vmatmul.f32.gmra.mxu0 %v722
        %v724 = vpop.f32.mrf.mxu0
        %v725 = vadd.f32 0.0, %v724
        %v726 = vand.u32 %v658, 4294901760
        %v727 = vsub.f32 %v658, %v726
        %v728 = vand.u32 %v727, 4294901760
        %v729 = vsub.f32 %v727, %v728
        %v730 = vand.u32 %v729, 4294901760
        %731 = vmatmul.f32.gmra.mxu0 %v730
        %v732 = vpop.f32.mrf.mxu0
        %v733 = vadd.f32 0.0, %v732
        %v734 = vand.u32 %v661, 4294901760
        %v735 = vsub.f32 %v661, %v734
        %v736 = vand.u32 %v735, 4294901760
        %v737 = vsub.f32 %v735, %v736
        %v738 = vand.u32 %v737, 4294901760
        %739 = vmatmul.f32.gmra.mxu0 %v738
        %v740 = vpop.f32.mrf.mxu0
        %v741 = vadd.f32 0.0, %v740
        %v742 = vand.u32 %v664, 4294901760
        %v743 = vsub.f32 %v664, %v742
        %v744 = vand.u32 %v743, 4294901760
        %v745 = vsub.f32 %v743, %v744
        %v746 = vand.u32 %v745, 4294901760
        %747 = vmatmul.f32.gmra.mxu0 %v746
        %v748 = vpop.f32.mrf.mxu0
        %v749 = vadd.f32 0.0, %v748
        %v750 = vand.u32 %v667, 4294901760
        %v751 = vsub.f32 %v667, %v750
        %v752 = vand.u32 %v751, 4294901760
        %v753 = vsub.f32 %v751, %v752
        %v754 = vand.u32 %v753, 4294901760
        %755 = vmatmul.f32.gmra.mxu0 %v754
        %v756 = vpop.f32.mrf.mxu0
        %v757 = vadd.f32 0.0, %v756
        %758 = vdwg.mxu0
        %759 = vmatpush.msra.mxu0 0.0
        %760 = vmatpush.msra.mxu0 0.0
        %761 = vmatpush.msra.mxu0 0.0
        %762 = vmatpush.msra.mxu0 0.0
        %763 = vmatpush.msra.mxu0 0.0
        %764 = vmatpush.msra.mxu0 0.0
        %765 = vmatpush.msra.mxu0 0.0
        %766 = vmatpush.msra.mxu0 0.0
        %767 = vmatpush.msra.mxu0 0.0
        %768 = vmatpush.msra.mxu0 0.0
        %769 = vmatpush.msra.mxu0 0.0
        %v770 = vand.u32 %v671, 4294901760
        %v771 = vsub.f32 %v671, %v770
        %v772 = vand.u32 %v771, 4294901760
        %v773 = vsub.f32 %v771, %v772
        %v774 = vand.u32 %v773, 4294901760
        %775 = vmatpush.msra.mxu0 %v774
        %v776 = vand.u32 %v642, 4294901760
        %v777 = vsub.f32 %v642, %v776
        %v778 = vand.u32 %v777, 4294901760
        %v779 = vsub.f32 %v777, %v778
        %v780 = vand.u32 %v779, 4294901760
        %781 = vmatpush.msra.mxu0 %v780
        %v782 = vand.u32 %v641, 4294901760
        %v783 = vsub.f32 %v641, %v782
        %v784 = vand.u32 %v783, 4294901760
        %v785 = vsub.f32 %v783, %v784
        %v786 = vand.u32 %v785, 4294901760
        %787 = vmatpush.msra.mxu0 %v786
        %v788 = vand.u32 %v640, 4294901760
        %v789 = vsub.f32 %v640, %v788
        %v790 = vand.u32 %v789, 4294901760
        %v791 = vsub.f32 %v789, %v790
        %v792 = vand.u32 %v791, 4294901760
        %793 = vmatpush.msra.mxu0 %v792
        %v794 = vand.u32 %v639, 4294901760
        %v795 = vsub.f32 %v639, %v794
        %v796 = vand.u32 %v795, 4294901760
        %v797 = vsub.f32 %v795, %v796
        %v798 = vand.u32 %v797, 4294901760
        %799 = vmatpush.msra.mxu0 %v798
        %v800 = vand.u32 %v646, 4294901760
        %801 = vmatmul.f32.gmra.mxu0 %v800
        %v802 = vpop.f32.mrf.mxu0
        %v803 = vadd.f32 %v701, %v802
        %v804 = vand.u32 %v649, 4294901760
        %805 = vmatmul.f32.gmra.mxu0 %v804
        %v806 = vpop.f32.mrf.mxu0
        %v807 = vadd.f32 %v709, %v806
        %v808 = vand.u32 %v652, 4294901760
        %809 = vmatmul.f32.gmra.mxu0 %v808
        %v810 = vpop.f32.mrf.mxu0
        %v811 = vadd.f32 %v717, %v810
        %v812 = vand.u32 %v655, 4294901760
        %813 = vmatmul.f32.gmra.mxu0 %v812
        %v814 = vpop.f32.mrf.mxu0
        %v815 = vadd.f32 %v725, %v814
        %v816 = vand.u32 %v658, 4294901760
        %817 = vmatmul.f32.gmra.mxu0 %v816
        %v818 = vpop.f32.mrf.mxu0
        %v819 = vadd.f32 %v733, %v818
        %v820 = vand.u32 %v661, 4294901760
        %821 = vmatmul.f32.gmra.mxu0 %v820
        %v822 = vpop.f32.mrf.mxu0
        %v823 = vadd.f32 %v741, %v822
        %v824 = vand.u32 %v664, 4294901760
        %825 = vmatmul.f32.gmra.mxu0 %v824
        %v826 = vpop.f32.mrf.mxu0
        %v827 = vadd.f32 %v749, %v826
        %v828 = vand.u32 %v667, 4294901760
        %829 = vmatmul.f32.gmra.mxu0 %v828
        %v830 = vpop.f32.mrf.mxu0
        %v831 = vadd.f32 %v757, %v830
        %832 = vdwg.mxu0
        %833 = vmatpush.msra.mxu0 0.0
        %834 = vmatpush.msra.mxu0 0.0
        %835 = vmatpush.msra.mxu0 0.0
        %836 = vmatpush.msra.mxu0 0.0
        %837 = vmatpush.msra.mxu0 0.0
        %838 = vmatpush.msra.mxu0 0.0
        %839 = vmatpush.msra.mxu0 0.0
        %840 = vmatpush.msra.mxu0 0.0
        %841 = vmatpush.msra.mxu0 0.0
        %842 = vmatpush.msra.mxu0 0.0
        %843 = vmatpush.msra.mxu0 0.0
        %v844 = vand.u32 %v671, 4294901760
        %v845 = vsub.f32 %v671, %v844
        %846 = vmatpush.msra.mxu0 %v845
        %v847 = vand.u32 %v642, 4294901760
        %v848 = vsub.f32 %v642, %v847
        %849 = vmatpush.msra.mxu0 %v848
        %v850 = vand.u32 %v641, 4294901760
        %v851 = vsub.f32 %v641, %v850
        %852 = vmatpush.msra.mxu0 %v851
        %v853 = vand.u32 %v640, 4294901760
        %v854 = vsub.f32 %v640, %v853
        %855 = vmatpush.msra.mxu0 %v854
        %v856 = vand.u32 %v639, 4294901760
        %v857 = vsub.f32 %v639, %v856
        %858 = vmatpush.msra.mxu0 %v857
        %v859 = vand.u32 %v646, 4294901760
        %v860 = vsub.f32 %v646, %v859
        %861 = vmatmul.f32.gmra.mxu0 %v860
        %v862 = vpop.f32.mrf.mxu0
        %v863 = vadd.f32 %v803, %v862
        %v864 = vand.u32 %v649, 4294901760
        %v865 = vsub.f32 %v649, %v864
        %866 = vmatmul.f32.gmra.mxu0 %v865
        %v867 = vpop.f32.mrf.mxu0
        %v868 = vadd.f32 %v807, %v867
        %v869 = vand.u32 %v652, 4294901760
        %v870 = vsub.f32 %v652, %v869
        %871 = vmatmul.f32.gmra.mxu0 %v870
        %v872 = vpop.f32.mrf.mxu0
        %v873 = vadd.f32 %v811, %v872
        %v874 = vand.u32 %v655, 4294901760
        %v875 = vsub.f32 %v655, %v874
        %876 = vmatmul.f32.gmra.mxu0 %v875
        %v877 = vpop.f32.mrf.mxu0
        %v878 = vadd.f32 %v815, %v877
        %v879 = vand.u32 %v658, 4294901760
        %v880 = vsub.f32 %v658, %v879
        %881 = vmatmul.f32.gmra.mxu0 %v880
        %v882 = vpop.f32.mrf.mxu0
        %v883 = vadd.f32 %v819, %v882
        %v884 = vand.u32 %v661, 4294901760
        %v885 = vsub.f32 %v661, %v884
        %886 = vmatmul.f32.gmra.mxu0 %v885
        %v887 = vpop.f32.mrf.mxu0
        %v888 = vadd.f32 %v823, %v887
        %v889 = vand.u32 %v664, 4294901760
        %v890 = vsub.f32 %v664, %v889
        %891 = vmatmul.f32.gmra.mxu0 %v890
        %v892 = vpop.f32.mrf.mxu0
        %v893 = vadd.f32 %v827, %v892
        %v894 = vand.u32 %v667, 4294901760
        %v895 = vsub.f32 %v667, %v894
        %896 = vmatmul.f32.gmra.mxu0 %v895
        %v897 = vpop.f32.mrf.mxu0
        %v898 = vadd.f32 %v831, %v897
        %899 = vdwg.mxu0
        %900 = vmatpush.msra.mxu0 0.0
        %901 = vmatpush.msra.mxu0 0.0
        %902 = vmatpush.msra.mxu0 0.0
        %903 = vmatpush.msra.mxu0 0.0
        %904 = vmatpush.msra.mxu0 0.0
        %905 = vmatpush.msra.mxu0 0.0
        %906 = vmatpush.msra.mxu0 0.0
        %907 = vmatpush.msra.mxu0 0.0
        %908 = vmatpush.msra.mxu0 0.0
        %909 = vmatpush.msra.mxu0 0.0
        %910 = vmatpush.msra.mxu0 0.0
        %v911 = vand.u32 %v671, 4294901760
        %912 = vmatpush.msra.mxu0 %v911
        %v913 = vand.u32 %v642, 4294901760
        %914 = vmatpush.msra.mxu0 %v913
        %v915 = vand.u32 %v641, 4294901760
        %916 = vmatpush.msra.mxu0 %v915
        %v917 = vand.u32 %v640, 4294901760
        %918 = vmatpush.msra.mxu0 %v917
        %v919 = vand.u32 %v639, 4294901760
        %920 = vmatpush.msra.mxu0 %v919
        %v921 = vand.u32 %v646, 4294901760
        %v922 = vsub.f32 %v646, %v921
        %v923 = vand.u32 %v922, 4294901760
        %924 = vmatmul.f32.gmra.mxu0 %v923
        %v925 = vpop.f32.mrf.mxu0
        %v926 = vadd.f32 %v863, %v925
        %v927 = vand.u32 %v649, 4294901760
        %v928 = vsub.f32 %v649, %v927
        %v929 = vand.u32 %v928, 4294901760
        %930 = vmatmul.f32.gmra.mxu0 %v929
        %v931 = vpop.f32.mrf.mxu0
        %v932 = vadd.f32 %v868, %v931
        %v933 = vand.u32 %v652, 4294901760
        %v934 = vsub.f32 %v652, %v933
        %v935 = vand.u32 %v934, 4294901760
        %936 = vmatmul.f32.gmra.mxu0 %v935
        %v937 = vpop.f32.mrf.mxu0
        %v938 = vadd.f32 %v873, %v937
        %v939 = vand.u32 %v655, 4294901760
        %v940 = vsub.f32 %v655, %v939
        %v941 = vand.u32 %v940, 4294901760
        %942 = vmatmul.f32.gmra.mxu0 %v941
        %v943 = vpop.f32.mrf.mxu0
        %v944 = vadd.f32 %v878, %v943
        %v945 = vand.u32 %v658, 4294901760
        %v946 = vsub.f32 %v658, %v945
        %v947 = vand.u32 %v946, 4294901760
        %948 = vmatmul.f32.gmra.mxu0 %v947
        %v949 = vpop.f32.mrf.mxu0
        %v950 = vadd.f32 %v883, %v949
        %v951 = vand.u32 %v661, 4294901760
        %v952 = vsub.f32 %v661, %v951
        %v953 = vand.u32 %v952, 4294901760
        %954 = vmatmul.f32.gmra.mxu0 %v953
        %v955 = vpop.f32.mrf.mxu0
        %v956 = vadd.f32 %v888, %v955
        %v957 = vand.u32 %v664, 4294901760
        %v958 = vsub.f32 %v664, %v957
        %v959 = vand.u32 %v958, 4294901760
        %960 = vmatmul.f32.gmra.mxu0 %v959
        %v961 = vpop.f32.mrf.mxu0
        %v962 = vadd.f32 %v893, %v961
        %v963 = vand.u32 %v667, 4294901760
        %v964 = vsub.f32 %v667, %v963
        %v965 = vand.u32 %v964, 4294901760
        %966 = vmatmul.f32.gmra.mxu0 %v965
        %v967 = vpop.f32.mrf.mxu0
        %v968 = vadd.f32 %v898, %v967
        %969 = vdwg.mxu0
        %970 = vmatpush.msra.mxu0 0.0
        %971 = vmatpush.msra.mxu0 0.0
        %972 = vmatpush.msra.mxu0 0.0
        %973 = vmatpush.msra.mxu0 0.0
        %974 = vmatpush.msra.mxu0 0.0
        %975 = vmatpush.msra.mxu0 0.0
        %976 = vmatpush.msra.mxu0 0.0
        %977 = vmatpush.msra.mxu0 0.0
        %978 = vmatpush.msra.mxu0 0.0
        %979 = vmatpush.msra.mxu0 0.0
        %980 = vmatpush.msra.mxu0 0.0
        %v981 = vand.u32 %v671, 4294901760
        %v982 = vsub.f32 %v671, %v981
        %v983 = vand.u32 %v982, 4294901760
        %984 = vmatpush.msra.mxu0 %v983
        %v985 = vand.u32 %v642, 4294901760
        %v986 = vsub.f32 %v642, %v985
        %v987 = vand.u32 %v986, 4294901760
        %988 = vmatpush.msra.mxu0 %v987
        %v989 = vand.u32 %v641, 4294901760
        %v990 = vsub.f32 %v641, %v989
        %v991 = vand.u32 %v990, 4294901760
        %992 = vmatpush.msra.mxu0 %v991
        %v993 = vand.u32 %v640, 4294901760
        %v994 = vsub.f32 %v640, %v993
        %v995 = vand.u32 %v994, 4294901760
        %996 = vmatpush.msra.mxu0 %v995
        %v997 = vand.u32 %v639, 4294901760
        %v998 = vsub.f32 %v639, %v997
        %v999 = vand.u32 %v998, 4294901760
        %1000 = vmatpush.msra.mxu0 %v999
        %v1001 = vand.u32 %v646, 4294901760
        %1002 = vmatmul.f32.gmra.mxu0 %v1001
        %v1003 = vpop.f32.mrf.mxu0
        %v1004 = vadd.f32 %v926, %v1003
        %v1005 = vand.u32 %v649, 4294901760
        %1006 = vmatmul.f32.gmra.mxu0 %v1005
        %v1007 = vpop.f32.mrf.mxu0
        %v1008 = vadd.f32 %v932, %v1007
        %v1009 = vand.u32 %v652, 4294901760
        %1010 = vmatmul.f32.gmra.mxu0 %v1009
        %v1011 = vpop.f32.mrf.mxu0
        %v1012 = vadd.f32 %v938, %v1011
        %v1013 = vand.u32 %v655, 4294901760
        %1014 = vmatmul.f32.gmra.mxu0 %v1013
        %v1015 = vpop.f32.mrf.mxu0
        %v1016 = vadd.f32 %v944, %v1015
        %v1017 = vand.u32 %v658, 4294901760
        %1018 = vmatmul.f32.gmra.mxu0 %v1017
        %v1019 = vpop.f32.mrf.mxu0
        %v1020 = vadd.f32 %v950, %v1019
        %v1021 = vand.u32 %v661, 4294901760
        %1022 = vmatmul.f32.gmra.mxu0 %v1021
        %v1023 = vpop.f32.mrf.mxu0
        %v1024 = vadd.f32 %v956, %v1023
        %v1025 = vand.u32 %v664, 4294901760
        %1026 = vmatmul.f32.gmra.mxu0 %v1025
        %v1027 = vpop.f32.mrf.mxu0
        %v1028 = vadd.f32 %v962, %v1027
        %v1029 = vand.u32 %v667, 4294901760
        %1030 = vmatmul.f32.gmra.mxu0 %v1029
        %v1031 = vpop.f32.mrf.mxu0
        %v1032 = vadd.f32 %v968, %v1031
        %1033 = vdwg.mxu0
        %1034 = vmatpush.msra.mxu0 0.0
        %1035 = vmatpush.msra.mxu0 0.0
        %1036 = vmatpush.msra.mxu0 0.0
        %1037 = vmatpush.msra.mxu0 0.0
        %1038 = vmatpush.msra.mxu0 0.0
        %1039 = vmatpush.msra.mxu0 0.0
        %1040 = vmatpush.msra.mxu0 0.0
        %1041 = vmatpush.msra.mxu0 0.0
        %1042 = vmatpush.msra.mxu0 0.0
        %1043 = vmatpush.msra.mxu0 0.0
        %1044 = vmatpush.msra.mxu0 0.0
        %v1045 = vand.u32 %v671, 4294901760
        %1046 = vmatpush.msra.mxu0 %v1045
        %v1047 = vand.u32 %v642, 4294901760
        %1048 = vmatpush.msra.mxu0 %v1047
        %v1049 = vand.u32 %v641, 4294901760
        %1050 = vmatpush.msra.mxu0 %v1049
        %v1051 = vand.u32 %v640, 4294901760
        %1052 = vmatpush.msra.mxu0 %v1051
        %v1053 = vand.u32 %v639, 4294901760
        %1054 = vmatpush.msra.mxu0 %v1053
        %v1055 = vand.u32 %v646, 4294901760
        %1056 = vmatmul.f32.gmra.mxu0 %v1055
        %v1057 = vpop.f32.mrf.mxu0
        %v1058 = vadd.f32 %v1004, %v1057
        %v1059 = vand.u32 %v649, 4294901760
        %1060 = vmatmul.f32.gmra.mxu0 %v1059
        %v1061 = vpop.f32.mrf.mxu0
        %v1062 = vadd.f32 %v1008, %v1061
        %v1063 = vand.u32 %v652, 4294901760
        %1064 = vmatmul.f32.gmra.mxu0 %v1063
        %v1065 = vpop.f32.mrf.mxu0
        %v1066 = vadd.f32 %v1012, %v1065
        %v1067 = vand.u32 %v655, 4294901760
        %1068 = vmatmul.f32.gmra.mxu0 %v1067
        %v1069 = vpop.f32.mrf.mxu0
        %v1070 = vadd.f32 %v1016, %v1069
        %v1071 = vand.u32 %v658, 4294901760
        %1072 = vmatmul.f32.gmra.mxu0 %v1071
        %v1073 = vpop.f32.mrf.mxu0
        %v1074 = vadd.f32 %v1020, %v1073
        %v1075 = vand.u32 %v661, 4294901760
        %1076 = vmatmul.f32.gmra.mxu0 %v1075
        %v1077 = vpop.f32.mrf.mxu0
        %v1078 = vadd.f32 %v1024, %v1077
        %v1079 = vand.u32 %v664, 4294901760
        %1080 = vmatmul.f32.gmra.mxu0 %v1079
        %v1081 = vpop.f32.mrf.mxu0
        %v1082 = vadd.f32 %v1028, %v1081
        %v1083 = vand.u32 %v667, 4294901760
        %1084 = vmatmul.f32.gmra.mxu0 %v1083
        %v1085 = vpop.f32.mrf.mxu0
        %v1086 = vadd.f32 %v1032, %v1085
        %1087 = vdwg.mxu0
        %vm1088 = vcmask 64512
        %v1089 = vsel %vm1088, %v1058, 0.0
        %v1090 = vsel %vm1088, %v1062, 0.0
        %v1091 = vadd.f32 %v1089, %v1090
        %v1092 = vsel %vm1088, %v1066, 0.0
        %v1093 = vadd.f32 %v1091, %v1092
        %v1094 = vsel %vm1088, %v1070, 0.0
        %v1095 = vadd.f32 %v1093, %v1094
        %v1096 = vsel %vm1088, %v1074, 0.0
        %v1097 = vadd.f32 %v1095, %v1096
        %v1098 = vsel %vm1088, %v1078, 0.0
        %v1099 = vadd.f32 %v1097, %v1098
        %v1100 = vsel %vm1088, %v1082, 0.0
        %v1101 = vadd.f32 %v1099, %v1100
        %v1102 = vsel %vm1088, %v1086, 0.0
        %v1103 = vadd.f32 %v1101, %v1102
        %v1104 = vrot.slane %v1103, 4
        %v1105 = vadd.f32 %v1103, %v1104
        %v1106 = vrot.slane %v1105, 2
        %v1107 = vadd.f32 %v1105, %v1106
        %v1108 = vrot.slane %v1107, 1
        %v1109 = vadd.f32 %v1107, %v1108
        %vm1110 = vcmask 57344
        %1111 = vst.msk [vmem:[%s203] sm:$0x1] %vm1110, %v1109
        %v1112 = vmul.f32 %v1058, %v1058
        %v1113 = vmul.f32 %v1062, %v1062
        %v1114 = vmul.f32 %v1066, %v1066
        %v1115 = vmul.f32 %v1070, %v1070
        %v1116 = vmul.f32 %v1074, %v1074
        %v1117 = vmul.f32 %v1078, %v1078
        %v1118 = vmul.f32 %v1082, %v1082
        %v1119 = vmul.f32 %v1086, %v1086
        %v1120 = vsel %vm1088, %v1112, 0.0
        %v1121 = vsel %vm1088, %v1113, 0.0
        %v1122 = vadd.f32 %v1120, %v1121
        %v1123 = vsel %vm1088, %v1114, 0.0
        %v1124 = vadd.f32 %v1122, %v1123
        %v1125 = vsel %vm1088, %v1115, 0.0
        %v1126 = vadd.f32 %v1124, %v1125
        %v1127 = vsel %vm1088, %v1116, 0.0
        %v1128 = vadd.f32 %v1126, %v1127
        %v1129 = vsel %vm1088, %v1117, 0.0
        %v1130 = vadd.f32 %v1128, %v1129
        %v1131 = vsel %vm1088, %v1118, 0.0
        %v1132 = vadd.f32 %v1130, %v1131
        %v1133 = vsel %vm1088, %v1119, 0.0
        %v1134 = vadd.f32 %v1132, %v1133
        %v1135 = vrot.slane %v1134, 4
        %v1136 = vadd.f32 %v1134, %v1135
        %v1137 = vrot.slane %v1136, 2
        %v1138 = vadd.f32 %v1136, %v1137
        %v1139 = vrot.slane %v1138, 1
        %v1140 = vadd.f32 %v1138, %v1139
        %1141 = vst.msk [vmem:[%s209] sm:$0x1] %vm1110, %v1140
        %1142 = vst.msk [vmem:[%s197] sm:$0xff] %vm1088, %v1058
        %1143 = vst.msk [vmem:[%s197 + $0x8] sm:$0xff] %vm1088, %v1062
        %1144 = vst.msk [vmem:[%s197 + $0x10] sm:$0xff] %vm1088, %v1066
        %1145 = vst.msk [vmem:[%s197 + $0x18] sm:$0xff] %vm1088, %v1070
        %1146 = vst.msk [vmem:[%s197 + $0x20] sm:$0xff] %vm1088, %v1074
        %1147 = vst.msk [vmem:[%s197 + $0x28] sm:$0xff] %vm1088, %v1078
        %1148 = vst.msk [vmem:[%s197 + $0x30] sm:$0xff] %vm1088, %v1082
        %1149 = vst.msk [vmem:[%s197 + $0x38] sm:$0xff] %vm1088, %v1086
        %s1150 = sand.u32 %s77, 1
        %s1151 = scalar_lea.sflag [#allocation4], %s1150
        %s1152 = sand.u32 %s77, 1
        %s1153 = smul.addr %s1152, 64
        %s1154 = scalar_lea.vmem [#allocation3], %s1153
        %s1155 = sand.u32 %s22, 1
        %s1156 = scalar_lea.sflag [#allocation6], %s1155
        %s1157 = sand.u32 %s103, 1
        %s1158 = scalar_lea.vmem [#allocation5], %s1157
        %s1159 = sand.u32 %s22, 1
        %s1160 = scalar_lea.sflag [#allocation6], %s1159
        %s1161 = sand.u32 %s129, 1
        %s1162 = scalar_lea.vmem [#allocation7], %s1161
        // Predicated region
        $region29: #{tpu_custom_call.1} parent=27 // pred_check
          %p1163 = pneg %p87
        $region30: #{tpu_custom_call.1} parent=27 // pred_check_branch
          %1165 = sbr.rel (%p1163) target = $region32
        $region31: #{tpu_custom_call.1} parent=27 // pred_region
          %1167 = vsyncadd %s1151, 0
          %s1168 = smul.addr %s22, 8
          %s1169 = smul.addr %s1168, 8
          %s1170 = scalar_lea.hbm %s2, %s1169
          %s1171 = sshll.u32 %s1154, 4
          %s1172 = int_to_ptr.vmem [resolvable:$true] %s1171
          %s1173 = sshll.u32 %s1170, 4
          %s1174 = int_to_ptr.hbm [resolvable:$true] %s1173
          %1179 = dma.vmem_to_hbm [thread:$0]  %s1172, 1024, %s1174, %s1151, 128, 128, 8
        $region32: #{tpu_custom_call.1} parent=27 // pred_fallthru
          _
        // Predicated region
        $region33: #{tpu_custom_call.1} parent=27 // pred_check
          %p1180 = pneg %p113
        $region34: #{tpu_custom_call.1} parent=27 // pred_check_branch
          %1182 = sbr.rel (%p1180) target = $region36
        $region35: #{tpu_custom_call.1} parent=27 // pred_region
          %1184 = vsyncadd %s1156, 0
          %s1185 = scalar_lea.hbm %s3, %s22
          %s1187 = sshll.u32 %s1158, 4
          %s1188 = int_to_ptr.vmem [resolvable:$true] %s1187
          %s1189 = sshll.u32 %s1185, 4
          %s1190 = int_to_ptr.hbm [resolvable:$true] %s1189
          %1192 = dma.vmem_to_hbm [thread:$0]  %s1188, 16, %s1190, %s1156
        $region36: #{tpu_custom_call.1} parent=27 // pred_fallthru
          _
        // Predicated region
        $region37: #{tpu_custom_call.1} parent=27 // pred_check
          %p1193 = pneg %p139
        $region38: #{tpu_custom_call.1} parent=27 // pred_check_branch
          %1195 = sbr.rel (%p1193) target = $region40
        $region39: #{tpu_custom_call.1} parent=27 // pred_region
          %1197 = vsyncadd %s1160, 0
          %s1198 = scalar_lea.hbm %s4, %s22
          %s1200 = sshll.u32 %s1162, 4
          %s1201 = int_to_ptr.vmem [resolvable:$true] %s1200
          %s1202 = sshll.u32 %s1198, 4
          %s1203 = int_to_ptr.hbm [resolvable:$true] %s1202
          %1205 = dma.vmem_to_hbm [thread:$0]  %s1201, 16, %s1203, %s1160
        $region40: #{tpu_custom_call.1} parent=27 // pred_fallthru
          _
      $region28: #{tpu_custom_call.1} parent=5 // pred_fallthru
        _
      %p1206 = scmp.le.s32.totalorder 2, %s17
      // Predicated region
      $region41: #{tpu_custom_call.1} parent=5 // pred_check
        %p1207 = pneg %p1206
      $region42: #{tpu_custom_call.1} parent=5 // pred_check_branch
        %1209 = sbr.rel (%p1207) target = $region44
      $region43: #{tpu_custom_call.1} parent=5 // pred_region
        %s1210 = ssub.s32 %s17, 2
        // Predicated region
        $region45: #{tpu_custom_call.1} parent=43 // pred_check
          %p1211 = pneg %p93
        $region46: #{tpu_custom_call.1} parent=43 // pred_check_branch
          %1213 = sbr.rel (%p1211) target = $region48
        $region47: #{tpu_custom_call.1} parent=43 // pred_region
          %s1214 = sand.u32 %s78, 1
          %s1215 = scalar_lea.sflag [#allocation4], %s1214
          %s1216 = sand.u32 %s78, 1
          %s1217 = smul.addr %s1216, 64
          %s1218 = scalar_lea.vmem [#allocation3], %s1217
          %1220 = dma.done %s1215, 1024
        $region48: #{tpu_custom_call.1} parent=43 // pred_fallthru
          _
        // Predicated region
        $region49: #{tpu_custom_call.1} parent=43 // pred_check
          %p1221 = pneg %p119
        $region50: #{tpu_custom_call.1} parent=43 // pred_check_branch
          %1223 = sbr.rel (%p1221) target = $region52
        $region51: #{tpu_custom_call.1} parent=43 // pred_region
          %s1224 = sand.u32 %s23, 1
          %s1225 = scalar_lea.sflag [#allocation6], %s1224
          %s1226 = sand.u32 %s104, 1
          %s1227 = scalar_lea.vmem [#allocation5], %s1226
          %1229 = dma.done %s1225, 16
        $region52: #{tpu_custom_call.1} parent=43 // pred_fallthru
          _
        // Predicated region
        $region53: #{tpu_custom_call.1} parent=43 // pred_check
          %p1230 = pneg %p145
        $region54: #{tpu_custom_call.1} parent=43 // pred_check_branch
          %1232 = sbr.rel (%p1230) target = $region56
        $region55: #{tpu_custom_call.1} parent=43 // pred_region
          %s1233 = sand.u32 %s23, 1
          %s1234 = scalar_lea.sflag [#allocation6], %s1233
          %s1235 = sand.u32 %s130, 1
          %s1236 = scalar_lea.vmem [#allocation7], %s1235
          %1238 = dma.done %s1234, 16
        $region56: #{tpu_custom_call.1} parent=43 // pred_fallthru
          _
      $region44: #{tpu_custom_call.1} parent=5 // pred_fallthru
        _
    $region6: #{tpu_custom_call.1} parent=1 // loop_footer
      %s21 = sadd.s32 1, %s17
    $region7: #{tpu_custom_call.1} parent=1 // loop_footer_branch
      %16 = sbr.rel target = $region3
    $region8: #{tpu_custom_call.1} parent=1 // loop_exit
      _
    %1239 = vsyncpa [#allocation4], 1
    %s1240 = scalar_lea.sflag [#allocation4], 1
    %1241 = vsyncpa %s1240, 1
    %1242 = vsyncpa [#allocation6], 1
    %s1243 = scalar_lea.sflag [#allocation6], 1
    %1244 = vsyncpa %s1243, 1

</llo_original>
